<compile_context>
chip_gen: v6e
topology: v6e:2x2x1
jax: 0.10.0
libtpu: 0.0.40
codegen_flags: <defaults>
</compile_context>

<pallas_src>
import functools

import jax
import jax.numpy as jnp
from jax import lax
from jax.experimental import pallas as pl
from jax.experimental.pallas import tpu as pltpu

BN_EPS = 1e-5  # torch BatchNorm1d default eps


# ------------------------- generation-aware sizing -------------------------

def _vmem_limit_bytes():
    """Scoped-VMEM budget: ~100 MiB on v5e/v6e (128 MiB physical), ~50 MiB on
    v7x (64 MiB physical); conservative fallback if the query fails."""
    try:
        cap = int(pltpu.get_tpu_info().vmem_capacity_bytes)
    except Exception:
        cap = 64 * 1024 * 1024
    return max(32 * 1024 * 1024, min(100 * 1024 * 1024, int(cap * 0.78)))


def _pick_divisor_tile(dim, cap):
    """Largest multiple of 128 <= cap that divides dim (else the full dim)."""
    t = min(cap, dim)
    t -= t % 128
    while t >= 128:
        if dim % t == 0:
            return t
        t -= 128
    return dim


def _pick_tn(n, m, tk, out_itemsize, vmem_limit, tn_max=1024):
    """Largest 128-multiple N tile whose (m,tn) f32 acc + double-buffered
    x/w/out blocks fit the VMEM budget (fewer x re-streams per layer)."""
    budget = int(0.6 * vmem_limit)
    best = _pick_divisor_tile(n, 128)
    cand = 128
    while cand <= min(n, tn_max):
        if n % cand == 0:
            use = (m * cand * 4                                    # f32 accumulator
                   + 2 * (m * tk * 2 + tk * cand * 2               # dbl-buf bf16 x/w
                          + m * cand * out_itemsize))              # dbl-buf out
            if use <= budget:
                best = cand
        cand += 128
    return best


def _pick_loss_tile(d, b, vmem_limit, td_max=1024):
    """Largest 128-multiple loss tile: (td,td) f32 c temp + dbl-buffered (b,td)
    f32 z blocks + lane accumulators must fit (fewer grid steps, less z re-DMA)."""
    budget = int(0.5 * vmem_limit)
    best = d if d % 128 else 128
    cand = 128
    while cand <= min(d, td_max):
        if d % cand == 0:
            use = cand * cand * 4 + 2 * 2 * b * cand * 4 + 2 * cand * 4
            if use <= budget:
                best = cand
        cand += 128
    return best


# ------------------------------ Pallas kernels ------------------------------

def _encoder_kernel(x_ref, w_ref, o_ref, *, samples, cout):
    """Stand-in encoder: per-sample 1x1 conv + ReLU, emitted directly as
    lane-dense flattened NCHW rows (row n = [feat[n,0,:], feat[n,1,:], ...]),
    so the whole (bn, Cout*H*W) block is written with wide unmasked stores and
    nn.Flatten() needs no further work."""
    w = w_ref[...]                                        # (Cout, Cin) bf16
    rows = []
    for n in range(samples):                              # static unroll
        feat = jnp.dot(w, x_ref[n], preferred_element_type=jnp.float32)  # (Cout, S)
        feat = jnp.maximum(feat, 0.0)
        rows.append(jnp.concatenate([feat[o:o + 1, :] for o in range(cout)],
                                    axis=-1))             # (1, Cout*S), NCHW order
    o_ref[...] = jnp.concatenate(rows, axis=0).astype(o_ref.dtype)


def _fused_projector_kernel(x_ref, *rest, num_layers):
    """Whole projector fused for one view: [Linear -> BN -> ReLU]* -> Linear ->
    output BatchNorm1d(affine=False).  All weights are VMEM-resident; grid=(2,)
    over views keeps BN statistics per view and feeds both v7x TensorCores.
    bf16 MXU inputs, f32 BN math, f32 normalized output."""
    w_refs = rest[:num_layers]
    o_ref = rest[num_layers]
    h = x_ref[...]                                        # (B, D0) bf16
    for li in range(num_layers):
        h = jnp.dot(h, w_refs[li][...], preferred_element_type=jnp.float32)
        mean = jnp.mean(h, axis=0, keepdims=True)
        var = jnp.mean((h - mean) ** 2, axis=0, keepdims=True)   # biased, torch BN fwd
        h = (h - mean) * lax.rsqrt(var + BN_EPS)
        if li < num_layers - 1:
            h = jnp.maximum(h, 0.0).astype(jnp.bfloat16)  # bf16 for the next MXU matmul
    o_ref[...] = h.astype(o_ref.dtype)                    # f32 normalized z


def _matmul_2view_kernel(x_ref, w_ref, o_ref, acc_ref, *, epilogue, view_rows):
    """Streaming fallback: tiled Linear(bias=False) over the stacked 2B batch
    with an f32 accumulator and a fused PER-VIEW BatchNorm/ReLU epilogue.
    Grid = (M_blocks, N_blocks, K_blocks); K is the sequential reduction axis."""
    k = pl.program_id(2)

    @pl.when(k == 0)
    def _():
        acc_ref[...] = jnp.zeros_like(acc_ref)

    acc_ref[...] += jnp.dot(x_ref[...], w_ref[...],
                            preferred_element_type=jnp.float32)

    @pl.when(k == pl.num_programs(2) - 1)
    def _():
        h = acc_ref[...]                                  # (2B, tn) f32
        if epilogue in ("bn_relu", "bn"):
            parts = []
            for v in range(2):                            # BN statistics per view
                hv = h[v * view_rows:(v + 1) * view_rows]
                mean = jnp.mean(hv, axis=0, keepdims=True)
                var = jnp.mean((hv - mean) ** 2, axis=0, keepdims=True)
                parts.append((hv - mean) * lax.rsqrt(var + BN_EPS))
            h = jnp.concatenate(parts, axis=0)
        if epilogue in ("bn_relu", "relu"):
            h = jnp.maximum(h, 0.0)
        o_ref[...] = h.astype(o_ref.dtype)


def _barlow_loss_kernel(z1_ref, z2_ref, part_ref, acc_c_ref, acc_d_ref, *,
                        inv_batch, lambd):
    """Tiled Barlow Twins loss on pre-normalized f32 z1, z2.

    Grid = (D/td, D/td) blocks of c = z1n.T @ z2n / batch_size, with i
    ("parallel") owning a row-block partial and j ("arbitrary") streaming the
    columns.  acc_c is a lane-shaped (1, td) bucket of sum(c^2) (sublane reduce
    only per block; lambd applied once at collapse); acc_d holds the diagonal
    correction, computed directly from the z columns on diagonal blocks."""
    i = pl.program_id(0)
    j = pl.program_id(1)

    @pl.when(j == 0)
    def _():
        acc_c_ref[...] = jnp.zeros_like(acc_c_ref)
        acc_d_ref[...] = jnp.zeros_like(acc_d_ref)

    z1 = z1_ref[...]                                      # (B, td) f32, i-columns of view 1
    z2 = z2_ref[...]                                      # (B, td) f32, j-columns of view 2
    # NOTE(v5e): if lower_as_mlir shows a per-step vxpose of z1 here, feed z1
    # pre-transposed instead; dims ((0,),(0,)) contracts over the batch axis.
    c = lax.dot_general(z1, z2, (((0,), (0,)), ((), ())),
                        preferred_element_type=jnp.float32) * inv_batch
    acc_c_ref[...] += jnp.sum(c * c, axis=0, keepdims=True)       # lane-shaped partial

    @pl.when(i == j)
    def _():
        diag = jnp.sum(z1 * z2, axis=0, keepdims=True) * inv_batch  # (1, td)
        acc_d_ref[...] += (diag - 1.0) ** 2 - lambd * diag * diag

    @pl.when(j == pl.num_programs(1) - 1)
    def _():
        val = lambd * jnp.sum(acc_c_ref[...]) + jnp.sum(acc_d_ref[...])
        part_ref[...] = jnp.full((1, 1, 128), val, jnp.float32)   # lane-dense store


# --------------------------------- wrappers ---------------------------------

def _tiled_linear_2view(x, w, *, epilogue, out_dtype, view_rows, vmem_limit):
    """Streaming projector layer over the stacked (2B, K) input (weight tiles
    are read once for both views)."""
    m, kdim = x.shape
    k2, n = w.shape
    assert kdim == k2
    tk = _pick_divisor_tile(kdim, 512)
    tn = _pick_tn(n, m, tk, jnp.dtype(out_dtype).itemsize, vmem_limit)
    if n // tn < 2 and tn % 256 == 0:
        tn //= 2        # expose a 2nd parallel N block for v7x's 2nd TensorCore
    assert n % tn == 0 and kdim % tk == 0
    grid = (1, n // tn, kdim // tk)   # full stacked batch resident -> exact BN stats

    return pl.pallas_call(
        functools.partial(_matmul_2view_kernel, epilogue=epilogue,
                          view_rows=view_rows),
        out_shape=jax.ShapeDtypeStruct((m, n), out_dtype),
        grid_spec=pltpu.PrefetchScalarGridSpec(
            num_scalar_prefetch=0,
            grid=grid,
            # (If weight DMA is exposed at large K, add
            #  pipeline_mode=pl.Buffered(3) on the weight spec.)
            in_specs=[pl.BlockSpec((m, tk), lambda i, j, k: (i, k)),
                      pl.BlockSpec((tk, tn), lambda i, j, k: (k, j))],
            out_specs=pl.BlockSpec((m, tn), lambda i, j, k: (i, j)),
            scratch_shapes=[pltpu.VMEM((m, tn), jnp.float32)]),
        compiler_params=pltpu.CompilerParams(
            dimension_semantics=("parallel", "parallel", "arbitrary"),
            vmem_limit_bytes=vmem_limit),
    )(x, w)


class BarlowTwinsPallas:
    """BarlowTwins forward: encoder -> projector -> cross-correlation loss."""

    def __init__(self, key, *, in_ch, enc_ch, h, w, projector_sizes,
                 batch_size, lambd):
        self.h, self.w = h, w
        self.batch_size = batch_size
        self.lambd = float(lambd)
        self.vmem_limit = _vmem_limit_bytes()
        sizes = list(projector_sizes)
        assert sizes[0] == enc_ch * h * w, \
            "projector input must match flattened encoder output"

        keys = jax.random.split(key, 1 + len(sizes) - 1)
        # Encoder weight stored as (Cout, Cin): the kernel computes W @ x[n],
        # which preserves NCHW order so nn.Flatten() needs no permutation.
        self.enc_w = (jax.random.normal(keys[0], (enc_ch, in_ch), jnp.float32)
                      / jnp.sqrt(jnp.float32(in_ch))).astype(jnp.bfloat16)
        self.proj_ws = []
        for i in range(len(sizes) - 1):
            wmat = (jax.random.normal(keys[1 + i], (sizes[i], sizes[i + 1]),
                                      jnp.float32)
                    / jnp.sqrt(jnp.float32(sizes[i]))).astype(jnp.bfloat16)
            self.proj_ws.append(wmat)

    # -------------------------------- encoder --------------------------------

    def _encode(self, x_nchw):
        n, c, h, w = x_nchw.shape
        s = h * w
        cout = self.enc_w.shape[0]
        x = x_nchw.reshape(n, c, s).astype(jnp.bfloat16)   # free NCHW reshape
        bn = n
        if n > 64:                                          # batch-block big batches
            for cand in (64, 32, 16, 8):
                if n % cand == 0:
                    bn = cand
                    break
        return pl.pallas_call(
            functools.partial(_encoder_kernel, samples=bn, cout=cout),
            out_shape=jax.ShapeDtypeStruct((n, cout * s), jnp.bfloat16),
            grid_spec=pltpu.PrefetchScalarGridSpec(
                num_scalar_prefetch=0,
                grid=(n // bn,),
                in_specs=[pl.BlockSpec((bn, c, s), lambda i: (i, 0, 0)),
                          pl.BlockSpec((cout, c), lambda i: (0, 0))],
                out_specs=pl.BlockSpec((bn, cout * s), lambda i: (i, 0))),
            compiler_params=pltpu.CompilerParams(
                dimension_semantics=("parallel",),
                vmem_limit_bytes=self.vmem_limit),
        )(x, self.enc_w)

    # ------------------------------- projector -------------------------------

    def _fused_projector_fits(self, m2):
        wbytes = sum(int(wm.size) * 2 for wm in self.proj_ws)
        maxd = max(max(wm.shape) for wm in self.proj_ws)
        act_bytes = m2 * maxd * 4 * 3
        return (m2 // 2) % 8 == 0 and (2 * wbytes + act_bytes) <= int(0.4 * self.vmem_limit)

    def _project_fused(self, x2b):
        m2, d0 = x2b.shape
        b = m2 // 2
        assert b % 8 == 0, "fused projector path needs a sublane-aligned view batch"
        dlast = self.proj_ws[-1].shape[1]
        nl = len(self.proj_ws)
        in_specs = [pl.BlockSpec((b, d0), lambda v: (v, 0))]
        for wmat in self.proj_ws:
            in_specs.append(pl.BlockSpec(wmat.shape, lambda v: (0, 0)))
        return pl.pallas_call(
            functools.partial(_fused_projector_kernel, num_layers=nl),
            out_shape=jax.ShapeDtypeStruct((m2, dlast), jnp.float32),
            grid_spec=pltpu.PrefetchScalarGridSpec(
                num_scalar_prefetch=0,
                grid=(2,),                                   # one view per grid step
                in_specs=in_specs,
                out_specs=pl.BlockSpec((b, dlast), lambda v: (v, 0))),
            compiler_params=pltpu.CompilerParams(
                dimension_semantics=("parallel",),           # views -> v7x's 2 TCs
                vmem_limit_bytes=self.vmem_limit),
        )(x2b, *self.proj_ws)

    def _project_streaming(self, x2b):
        vr = x2b.shape[0] // 2
        h = x2b
        for wmat in self.proj_ws[:-1]:
            h = _tiled_linear_2view(h, wmat, epilogue="bn_relu",
                                    out_dtype=jnp.bfloat16, view_rows=vr,
                                    vmem_limit=self.vmem_limit)
        # Final Linear(bias=False) with the output BatchNorm1d(affine=False)
        # fused: the loss only ever consumes bn(z).  Kept in f32.
        return _tiled_linear_2view(h, self.proj_ws[-1], epilogue="bn",
                                   out_dtype=jnp.float32, view_rows=vr,
                                   vmem_limit=self.vmem_limit)

    # --------------------------------- loss ----------------------------------

    def _loss(self, z):
        m2, d = z.shape
        b = m2 // 2
        td = _pick_loss_tile(d, b, self.vmem_limit)
        nblk = d // td
        kernel = functools.partial(_barlow_loss_kernel,
                                   inv_batch=1.0 / float(self.batch_size),
                                   lambd=self.lambd)
        if b % 8 == 0:
            # Read both views straight out of the stacked z (no HBM slice copies).
            z1_in, z2_in = z, z
            spec1 = pl.BlockSpec((b, td), lambda i, j: (0, i))
            spec2 = pl.BlockSpec((b, td), lambda i, j: (1, j))
        else:
            z1_in, z2_in = z[:b], z[b:]
            spec1 = pl.BlockSpec((b, td), lambda i, j: (0, i))
            spec2 = pl.BlockSpec((b, td), lambda i, j: (0, j))
        parts = pl.pallas_call(
            kernel,
            out_shape=jax.ShapeDtypeStruct((nblk, 1, 128), jnp.float32),
            grid_spec=pltpu.PrefetchScalarGridSpec(
                num_scalar_prefetch=0,
                grid=(nblk, nblk),
                in_specs=[spec1, spec2],
                out_specs=pl.BlockSpec((1, 1, 128), lambda i, j: (i, 0, 0)),
                scratch_shapes=[pltpu.VMEM((1, td), jnp.float32),
                                pltpu.VMEM((1, td), jnp.float32)]),
            compiler_params=pltpu.CompilerParams(
                dimension_semantics=("parallel", "arbitrary"),
                vmem_limit_bytes=self.vmem_limit),
        )(z1_in, z2_in)
        return jnp.sum(parts[:, 0, 0])

    # -------------------------------- forward --------------------------------

    def forward(self, y1, y2, *, projector_mode="auto"):
        assert y1.shape == y2.shape
        x = jnp.concatenate([y1, y2], axis=0)               # two-view stacking
        feat = self._encode(x)                               # (2B, D0) bf16
        mode = projector_mode
        if mode == "auto":
            mode = "fused" if self._fused_projector_fits(feat.shape[0]) else "streaming"
        z = (self._project_fused(feat) if mode == "fused"
             else self._project_streaming(feat))             # (2B, Dlast) f32
        return self._loss(z)

    # ------------------------ pure-JAX reference (check) ---------------------

    def reference_loss(self, y1, y2):
        hp = lax.Precision.HIGHEST

        def encode(y):
            n, c, h, w = y.shape
            x = y.reshape(n, c, h * w).astype(jnp.bfloat16).astype(jnp.float32)
            wenc = self.enc_w.astype(jnp.float32)
            feat = jnp.maximum(jnp.einsum('oc,ncs->nos', wenc, x, precision=hp), 0.0)
            return feat.reshape(n, -1).astype(jnp.bfloat16)

        def project(hh):
            nl = len(self.proj_ws)
            for li, wm in enumerate(self.proj_ws):
                hh = jnp.dot(hh.astype(jnp.float32), wm.astype(jnp.float32),
                             precision=hp)
                mean = jnp.mean(hh, axis=0, keepdims=True)
                var = jnp.mean((hh - mean) ** 2, axis=0, keepdims=True)
                hh = (hh - mean) * lax.rsqrt(var + BN_EPS)
                if li < nl - 1:
                    hh = jnp.maximum(hh, 0.0).astype(jnp.bfloat16)
            return hh

        z1 = project(encode(y1))
        z2 = project(encode(y2))
        c = jnp.dot(z1.T, z2, precision=hp) / float(self.batch_size)
        diag = jnp.diag(c)
        on_diag = jnp.sum((diag - 1.0) ** 2)
        off_diag = jnp.sum(c * c) - jnp.sum(diag * diag)
        return on_diag + self.lambd * off_diag


if __name__ == "__main__":
    key = jax.random.PRNGKey(0)
    kx1, kx2, kparams = jax.random.split(key, 3)

    B, C, H, W = 8, 4, 4, 4
    y1 = jax.random.normal(kx1, (B, C, H, W), jnp.float32)
    y2 = jax.random.normal(kx2, (B, C, H, W), jnp.float32)

    model = BarlowTwinsPallas(
        kparams, in_ch=C, enc_ch=8, h=H, w=W,
        projector_sizes=(128, 256, 128),   # args.projector = "128-256-128"
        batch_size=B, lambd=0.0051)

    loss_fused = model.forward(y1, y2)                            # fused projector
    loss_stream = model.forward(y1, y2, projector_mode="streaming")  # tiled fallback
    loss_ref = model.reference_loss(y1, y2)                       # pure-JAX reference
    jax.block_until_ready((loss_fused, loss_stream, loss_ref))

    assert jnp.isfinite(loss_fused) and jnp.isfinite(loss_stream)
    assert jnp.allclose(loss_fused, loss_ref, rtol=2e-2, atol=2e-2)
    assert jnp.allclose(loss_stream, loss_ref, rtol=2e-2, atol=2e-2)
    print("KERNEL_OK")
</pallas_src>

<mosaic_0001>
module attributes {stable_mosaic.version = 11 : i64} {
  func.func @_encoder_kernel(%arg0: i32, %arg1: memref<16x4x16xbf16, #tpu.memory_space<vmem>>, %arg2: memref<8x4xbf16, #tpu.memory_space<vmem>>, %arg3: memref<16x128xbf16, #tpu.memory_space<vmem>>) attributes {dimension_semantics = [#tpu.dimension_semantics<parallel>], iteration_bounds = array<i64: 1>, scalar_prefetch = 0 : i64, scratch_operands = 0 : i64, tpu.core_type = #tpu.core_type<tc>, window_params = [{transform_indices = @transform_0, window_bounds = array<i64: 16, 4, 16>}, {pipeline_mode = #tpu.pipeline_mode<synchronous>, transform_indices = @transform_1, window_bounds = array<i64: 8, 4>}, {transform_indices = @transform_2, window_bounds = array<i64: 16, 128>}]} {
    %c0 = arith.constant 0 : index
    %c0_0 = arith.constant 0 : index
    %0 = vector.load %arg2[%c0, %c0_0] : memref<8x4xbf16, #tpu.memory_space<vmem>>, vector<8x4xbf16>
    %c0_1 = arith.constant 0 : index
    %c0_2 = arith.constant 0 : index
    %c0_3 = arith.constant 0 : index
    %1 = vector.load %arg1[%c0_1, %c0_2, %c0_3] : memref<16x4x16xbf16, #tpu.memory_space<vmem>>, vector<1x4x16xbf16>
    %2 = vector.shape_cast %1 : vector<1x4x16xbf16> to vector<4x16xbf16>
    %cst = arith.constant dense<0.000000e+00> : vector<8x16xf32>
    %3 = tpu.matmul %0, %2, %cst {dimension_numbers = #tpu.dot_dimension_numbers<[1], [0], [0], [1], [0, 0, 1, 1], [], []>} : vector<8x4xbf16>, vector<4x16xbf16>, vector<8x16xf32> -> vector<8x16xf32>
    %cst_4 = arith.constant 0.000000e+00 : f32
    %4 = vector.broadcast %cst_4 : f32 to vector<8x16xf32>
    %5 = arith.maximumf %3, %4 : vector<8x16xf32>
    %6 = vector.extract_strided_slice %5 {offsets = [0, 0], sizes = [1, 16], strides = [1, 1]} : vector<8x16xf32> to vector<1x16xf32>
    %7 = vector.extract_strided_slice %5 {offsets = [1, 0], sizes = [1, 16], strides = [1, 1]} : vector<8x16xf32> to vector<1x16xf32>
    %8 = vector.extract_strided_slice %5 {offsets = [2, 0], sizes = [1, 16], strides = [1, 1]} : vector<8x16xf32> to vector<1x16xf32>
    %9 = vector.extract_strided_slice %5 {offsets = [3, 0], sizes = [1, 16], strides = [1, 1]} : vector<8x16xf32> to vector<1x16xf32>
    %10 = vector.extract_strided_slice %5 {offsets = [4, 0], sizes = [1, 16], strides = [1, 1]} : vector<8x16xf32> to vector<1x16xf32>
    %11 = vector.extract_strided_slice %5 {offsets = [5, 0], sizes = [1, 16], strides = [1, 1]} : vector<8x16xf32> to vector<1x16xf32>
    %12 = vector.extract_strided_slice %5 {offsets = [6, 0], sizes = [1, 16], strides = [1, 1]} : vector<8x16xf32> to vector<1x16xf32>
    %13 = vector.extract_strided_slice %5 {offsets = [7, 0], sizes = [1, 16], strides = [1, 1]} : vector<8x16xf32> to vector<1x16xf32>
    %14 = tpu.concatenate %6, %7, %8, %9, %10, %11, %12, %13 in 1 : vector<1x16xf32>, vector<1x16xf32>, vector<1x16xf32>, vector<1x16xf32>, vector<1x16xf32>, vector<1x16xf32>, vector<1x16xf32>, vector<1x16xf32> -> vector<1x128xf32>
    %c1 = arith.constant 1 : index
    %c0_5 = arith.constant 0 : index
    %c0_6 = arith.constant 0 : index
    %15 = vector.load %arg1[%c1, %c0_5, %c0_6] : memref<16x4x16xbf16, #tpu.memory_space<vmem>>, vector<1x4x16xbf16>
    %16 = vector.shape_cast %15 : vector<1x4x16xbf16> to vector<4x16xbf16>
    %cst_7 = arith.constant dense<0.000000e+00> : vector<8x16xf32>
    %17 = tpu.matmul %0, %16, %cst_7 {dimension_numbers = #tpu.dot_dimension_numbers<[1], [0], [0], [1], [0, 0, 1, 1], [], []>} : vector<8x4xbf16>, vector<4x16xbf16>, vector<8x16xf32> -> vector<8x16xf32>
    %cst_8 = arith.constant 0.000000e+00 : f32
    %18 = vector.broadcast %cst_8 : f32 to vector<8x16xf32>
    %19 = arith.maximumf %17, %18 : vector<8x16xf32>
    %20 = vector.extract_strided_slice %19 {offsets = [0, 0], sizes = [1, 16], strides = [1, 1]} : vector<8x16xf32> to vector<1x16xf32>
    %21 = vector.extract_strided_slice %19 {offsets = [1, 0], sizes = [1, 16], strides = [1, 1]} : vector<8x16xf32> to vector<1x16xf32>
    %22 = vector.extract_strided_slice %19 {offsets = [2, 0], sizes = [1, 16], strides = [1, 1]} : vector<8x16xf32> to vector<1x16xf32>
    %23 = vector.extract_strided_slice %19 {offsets = [3, 0], sizes = [1, 16], strides = [1, 1]} : vector<8x16xf32> to vector<1x16xf32>
    %24 = vector.extract_strided_slice %19 {offsets = [4, 0], sizes = [1, 16], strides = [1, 1]} : vector<8x16xf32> to vector<1x16xf32>
    %25 = vector.extract_strided_slice %19 {offsets = [5, 0], sizes = [1, 16], strides = [1, 1]} : vector<8x16xf32> to vector<1x16xf32>
    %26 = vector.extract_strided_slice %19 {offsets = [6, 0], sizes = [1, 16], strides = [1, 1]} : vector<8x16xf32> to vector<1x16xf32>
    %27 = vector.extract_strided_slice %19 {offsets = [7, 0], sizes = [1, 16], strides = [1, 1]} : vector<8x16xf32> to vector<1x16xf32>
    %28 = tpu.concatenate %20, %21, %22, %23, %24, %25, %26, %27 in 1 : vector<1x16xf32>, vector<1x16xf32>, vector<1x16xf32>, vector<1x16xf32>, vector<1x16xf32>, vector<1x16xf32>, vector<1x16xf32>, vector<1x16xf32> -> vector<1x128xf32>
    %c2 = arith.constant 2 : index
    %c0_9 = arith.constant 0 : index
    %c0_10 = arith.constant 0 : index
    %29 = vector.load %arg1[%c2, %c0_9, %c0_10] : memref<16x4x16xbf16, #tpu.memory_space<vmem>>, vector<1x4x16xbf16>
    %30 = vector.shape_cast %29 : vector<1x4x16xbf16> to vector<4x16xbf16>
    %cst_11 = arith.constant dense<0.000000e+00> : vector<8x16xf32>
    %31 = tpu.matmul %0, %30, %cst_11 {dimension_numbers = #tpu.dot_dimension_numbers<[1], [0], [0], [1], [0, 0, 1, 1], [], []>} : vector<8x4xbf16>, vector<4x16xbf16>, vector<8x16xf32> -> vector<8x16xf32>
    %cst_12 = arith.constant 0.000000e+00 : f32
    %32 = vector.broadcast %cst_12 : f32 to vector<8x16xf32>
    %33 = arith.maximumf %31, %32 : vector<8x16xf32>
    %34 = vector.extract_strided_slice %33 {offsets = [0, 0], sizes = [1, 16], strides = [1, 1]} : vector<8x16xf32> to vector<1x16xf32>
    %35 = vector.extract_strided_slice %33 {offsets = [1, 0], sizes = [1, 16], strides = [1, 1]} : vector<8x16xf32> to vector<1x16xf32>
    %36 = vector.extract_strided_slice %33 {offsets = [2, 0], sizes = [1, 16], strides = [1, 1]} : vector<8x16xf32> to vector<1x16xf32>
    %37 = vector.extract_strided_slice %33 {offsets = [3, 0], sizes = [1, 16], strides = [1, 1]} : vector<8x16xf32> to vector<1x16xf32>
    %38 = vector.extract_strided_slice %33 {offsets = [4, 0], sizes = [1, 16], strides = [1, 1]} : vector<8x16xf32> to vector<1x16xf32>
    %39 = vector.extract_strided_slice %33 {offsets = [5, 0], sizes = [1, 16], strides = [1, 1]} : vector<8x16xf32> to vector<1x16xf32>
    %40 = vector.extract_strided_slice %33 {offsets = [6, 0], sizes = [1, 16], strides = [1, 1]} : vector<8x16xf32> to vector<1x16xf32>
    %41 = vector.extract_strided_slice %33 {offsets = [7, 0], sizes = [1, 16], strides = [1, 1]} : vector<8x16xf32> to vector<1x16xf32>
    %42 = tpu.concatenate %34, %35, %36, %37, %38, %39, %40, %41 in 1 : vector<1x16xf32>, vector<1x16xf32>, vector<1x16xf32>, vector<1x16xf32>, vector<1x16xf32>, vector<1x16xf32>, vector<1x16xf32>, vector<1x16xf32> -> vector<1x128xf32>
    %c3 = arith.constant 3 : index
    %c0_13 = arith.constant 0 : index
    %c0_14 = arith.constant 0 : index
    %43 = vector.load %arg1[%c3, %c0_13, %c0_14] : memref<16x4x16xbf16, #tpu.memory_space<vmem>>, vector<1x4x16xbf16>
    %44 = vector.shape_cast %43 : vector<1x4x16xbf16> to vector<4x16xbf16>
    %cst_15 = arith.constant dense<0.000000e+00> : vector<8x16xf32>
    %45 = tpu.matmul %0, %44, %cst_15 {dimension_numbers = #tpu.dot_dimension_numbers<[1], [0], [0], [1], [0, 0, 1, 1], [], []>} : vector<8x4xbf16>, vector<4x16xbf16>, vector<8x16xf32> -> vector<8x16xf32>
    %cst_16 = arith.constant 0.000000e+00 : f32
    %46 = vector.broadcast %cst_16 : f32 to vector<8x16xf32>
    %47 = arith.maximumf %45, %46 : vector<8x16xf32>
    %48 = vector.extract_strided_slice %47 {offsets = [0, 0], sizes = [1, 16], strides = [1, 1]} : vector<8x16xf32> to vector<1x16xf32>
    %49 = vector.extract_strided_slice %47 {offsets = [1, 0], sizes = [1, 16], strides = [1, 1]} : vector<8x16xf32> to vector<1x16xf32>
    %50 = vector.extract_strided_slice %47 {offsets = [2, 0], sizes = [1, 16], strides = [1, 1]} : vector<8x16xf32> to vector<1x16xf32>
    %51 = vector.extract_strided_slice %47 {offsets = [3, 0], sizes = [1, 16], strides = [1, 1]} : vector<8x16xf32> to vector<1x16xf32>
    %52 = vector.extract_strided_slice %47 {offsets = [4, 0], sizes = [1, 16], strides = [1, 1]} : vector<8x16xf32> to vector<1x16xf32>
    %53 = vector.extract_strided_slice %47 {offsets = [5, 0], sizes = [1, 16], strides = [1, 1]} : vector<8x16xf32> to vector<1x16xf32>
    %54 = vector.extract_strided_slice %47 {offsets = [6, 0], sizes = [1, 16], strides = [1, 1]} : vector<8x16xf32> to vector<1x16xf32>
    %55 = vector.extract_strided_slice %47 {offsets = [7, 0], sizes = [1, 16], strides = [1, 1]} : vector<8x16xf32> to vector<1x16xf32>
    %56 = tpu.concatenate %48, %49, %50, %51, %52, %53, %54, %55 in 1 : vector<1x16xf32>, vector<1x16xf32>, vector<1x16xf32>, vector<1x16xf32>, vector<1x16xf32>, vector<1x16xf32>, vector<1x16xf32>, vector<1x16xf32> -> vector<1x128xf32>
    %c4 = arith.constant 4 : index
    %c0_17 = arith.constant 0 : index
    %c0_18 = arith.constant 0 : index
    %57 = vector.load %arg1[%c4, %c0_17, %c0_18] : memref<16x4x16xbf16, #tpu.memory_space<vmem>>, vector<1x4x16xbf16>
    %58 = vector.shape_cast %57 : vector<1x4x16xbf16> to vector<4x16xbf16>
    %cst_19 = arith.constant dense<0.000000e+00> : vector<8x16xf32>
    %59 = tpu.matmul %0, %58, %cst_19 {dimension_numbers = #tpu.dot_dimension_numbers<[1], [0], [0], [1], [0, 0, 1, 1], [], []>} : vector<8x4xbf16>, vector<4x16xbf16>, vector<8x16xf32> -> vector<8x16xf32>
    %cst_20 = arith.constant 0.000000e+00 : f32
    %60 = vector.broadcast %cst_20 : f32 to vector<8x16xf32>
    %61 = arith.maximumf %59, %60 : vector<8x16xf32>
    %62 = vector.extract_strided_slice %61 {offsets = [0, 0], sizes = [1, 16], strides = [1, 1]} : vector<8x16xf32> to vector<1x16xf32>
    %63 = vector.extract_strided_slice %61 {offsets = [1, 0], sizes = [1, 16], strides = [1, 1]} : vector<8x16xf32> to vector<1x16xf32>
    %64 = vector.extract_strided_slice %61 {offsets = [2, 0], sizes = [1, 16], strides = [1, 1]} : vector<8x16xf32> to vector<1x16xf32>
    %65 = vector.extract_strided_slice %61 {offsets = [3, 0], sizes = [1, 16], strides = [1, 1]} : vector<8x16xf32> to vector<1x16xf32>
    %66 = vector.extract_strided_slice %61 {offsets = [4, 0], sizes = [1, 16], strides = [1, 1]} : vector<8x16xf32> to vector<1x16xf32>
    %67 = vector.extract_strided_slice %61 {offsets = [5, 0], sizes = [1, 16], strides = [1, 1]} : vector<8x16xf32> to vector<1x16xf32>
    %68 = vector.extract_strided_slice %61 {offsets = [6, 0], sizes = [1, 16], strides = [1, 1]} : vector<8x16xf32> to vector<1x16xf32>
    %69 = vector.extract_strided_slice %61 {offsets = [7, 0], sizes = [1, 16], strides = [1, 1]} : vector<8x16xf32> to vector<1x16xf32>
    %70 = tpu.concatenate %62, %63, %64, %65, %66, %67, %68, %69 in 1 : vector<1x16xf32>, vector<1x16xf32>, vector<1x16xf32>, vector<1x16xf32>, vector<1x16xf32>, vector<1x16xf32>, vector<1x16xf32>, vector<1x16xf32> -> vector<1x128xf32>
    %c5 = arith.constant 5 : index
    %c0_21 = arith.constant 0 : index
    %c0_22 = arith.constant 0 : index
    %71 = vector.load %arg1[%c5, %c0_21, %c0_22] : memref<16x4x16xbf16, #tpu.memory_space<vmem>>, vector<1x4x16xbf16>
    %72 = vector.shape_cast %71 : vector<1x4x16xbf16> to vector<4x16xbf16>
    %cst_23 = arith.constant dense<0.000000e+00> : vector<8x16xf32>
    %73 = tpu.matmul %0, %72, %cst_23 {dimension_numbers = #tpu.dot_dimension_numbers<[1], [0], [0], [1], [0, 0, 1, 1], [], []>} : vector<8x4xbf16>, vector<4x16xbf16>, vector<8x16xf32> -> vector<8x16xf32>
    %cst_24 = arith.constant 0.000000e+00 : f32
    %74 = vector.broadcast %cst_24 : f32 to vector<8x16xf32>
    %75 = arith.maximumf %73, %74 : vector<8x16xf32>
    %76 = vector.extract_strided_slice %75 {offsets = [0, 0], sizes = [1, 16], strides = [1, 1]} : vector<8x16xf32> to vector<1x16xf32>
    %77 = vector.extract_strided_slice %75 {offsets = [1, 0], sizes = [1, 16], strides = [1, 1]} : vector<8x16xf32> to vector<1x16xf32>
    %78 = vector.extract_strided_slice %75 {offsets = [2, 0], sizes = [1, 16], strides = [1, 1]} : vector<8x16xf32> to vector<1x16xf32>
    %79 = vector.extract_strided_slice %75 {offsets = [3, 0], sizes = [1, 16], strides = [1, 1]} : vector<8x16xf32> to vector<1x16xf32>
    %80 = vector.extract_strided_slice %75 {offsets = [4, 0], sizes = [1, 16], strides = [1, 1]} : vector<8x16xf32> to vector<1x16xf32>
    %81 = vector.extract_strided_slice %75 {offsets = [5, 0], sizes = [1, 16], strides = [1, 1]} : vector<8x16xf32> to vector<1x16xf32>
    %82 = vector.extract_strided_slice %75 {offsets = [6, 0], sizes = [1, 16], strides = [1, 1]} : vector<8x16xf32> to vector<1x16xf32>
    %83 = vector.extract_strided_slice %75 {offsets = [7, 0], sizes = [1, 16], strides = [1, 1]} : vector<8x16xf32> to vector<1x16xf32>
    %84 = tpu.concatenate %76, %77, %78, %79, %80, %81, %82, %83 in 1 : vector<1x16xf32>, vector<1x16xf32>, vector<1x16xf32>, vector<1x16xf32>, vector<1x16xf32>, vector<1x16xf32>, vector<1x16xf32>, vector<1x16xf32> -> vector<1x128xf32>
    %c6 = arith.constant 6 : index
    %c0_25 = arith.constant 0 : index
    %c0_26 = arith.constant 0 : index
    %85 = vector.load %arg1[%c6, %c0_25, %c0_26] : memref<16x4x16xbf16, #tpu.memory_space<vmem>>, vector<1x4x16xbf16>
    %86 = vector.shape_cast %85 : vector<1x4x16xbf16> to vector<4x16xbf16>
    %cst_27 = arith.constant dense<0.000000e+00> : vector<8x16xf32>
    %87 = tpu.matmul %0, %86, %cst_27 {dimension_numbers = #tpu.dot_dimension_numbers<[1], [0], [0], [1], [0, 0, 1, 1], [], []>} : vector<8x4xbf16>, vector<4x16xbf16>, vector<8x16xf32> -> vector<8x16xf32>
    %cst_28 = arith.constant 0.000000e+00 : f32
    %88 = vector.broadcast %cst_28 : f32 to vector<8x16xf32>
    %89 = arith.maximumf %87, %88 : vector<8x16xf32>
    %90 = vector.extract_strided_slice %89 {offsets = [0, 0], sizes = [1, 16], strides = [1, 1]} : vector<8x16xf32> to vector<1x16xf32>
    %91 = vector.extract_strided_slice %89 {offsets = [1, 0], sizes = [1, 16], strides = [1, 1]} : vector<8x16xf32> to vector<1x16xf32>
    %92 = vector.extract_strided_slice %89 {offsets = [2, 0], sizes = [1, 16], strides = [1, 1]} : vector<8x16xf32> to vector<1x16xf32>
    %93 = vector.extract_strided_slice %89 {offsets = [3, 0], sizes = [1, 16], strides = [1, 1]} : vector<8x16xf32> to vector<1x16xf32>
    %94 = vector.extract_strided_slice %89 {offsets = [4, 0], sizes = [1, 16], strides = [1, 1]} : vector<8x16xf32> to vector<1x16xf32>
    %95 = vector.extract_strided_slice %89 {offsets = [5, 0], sizes = [1, 16], strides = [1, 1]} : vector<8x16xf32> to vector<1x16xf32>
    %96 = vector.extract_strided_slice %89 {offsets = [6, 0], sizes = [1, 16], strides = [1, 1]} : vector<8x16xf32> to vector<1x16xf32>
    %97 = vector.extract_strided_slice %89 {offsets = [7, 0], sizes = [1, 16], strides = [1, 1]} : vector<8x16xf32> to vector<1x16xf32>
    %98 = tpu.concatenate %90, %91, %92, %93, %94, %95, %96, %97 in 1 : vector<1x16xf32>, vector<1x16xf32>, vector<1x16xf32>, vector<1x16xf32>, vector<1x16xf32>, vector<1x16xf32>, vector<1x16xf32>, vector<1x16xf32> -> vector<1x128xf32>
    %c7 = arith.constant 7 : index
    %c0_29 = arith.constant 0 : index
    %c0_30 = arith.constant 0 : index
    %99 = vector.load %arg1[%c7, %c0_29, %c0_30] : memref<16x4x16xbf16, #tpu.memory_space<vmem>>, vector<1x4x16xbf16>
    %100 = vector.shape_cast %99 : vector<1x4x16xbf16> to vector<4x16xbf16>
    %cst_31 = arith.constant dense<0.000000e+00> : vector<8x16xf32>
    %101 = tpu.matmul %0, %100, %cst_31 {dimension_numbers = #tpu.dot_dimension_numbers<[1], [0], [0], [1], [0, 0, 1, 1], [], []>} : vector<8x4xbf16>, vector<4x16xbf16>, vector<8x16xf32> -> vector<8x16xf32>
    %cst_32 = arith.constant 0.000000e+00 : f32
    %102 = vector.broadcast %cst_32 : f32 to vector<8x16xf32>
    %103 = arith.maximumf %101, %102 : vector<8x16xf32>
    %104 = vector.extract_strided_slice %103 {offsets = [0, 0], sizes = [1, 16], strides = [1, 1]} : vector<8x16xf32> to vector<1x16xf32>
    %105 = vector.extract_strided_slice %103 {offsets = [1, 0], sizes = [1, 16], strides = [1, 1]} : vector<8x16xf32> to vector<1x16xf32>
    %106 = vector.extract_strided_slice %103 {offsets = [2, 0], sizes = [1, 16], strides = [1, 1]} : vector<8x16xf32> to vector<1x16xf32>
    %107 = vector.extract_strided_slice %103 {offsets = [3, 0], sizes = [1, 16], strides = [1, 1]} : vector<8x16xf32> to vector<1x16xf32>
    %108 = vector.extract_strided_slice %103 {offsets = [4, 0], sizes = [1, 16], strides = [1, 1]} : vector<8x16xf32> to vector<1x16xf32>
    %109 = vector.extract_strided_slice %103 {offsets = [5, 0], sizes = [1, 16], strides = [1, 1]} : vector<8x16xf32> to vector<1x16xf32>
    %110 = vector.extract_strided_slice %103 {offsets = [6, 0], sizes = [1, 16], strides = [1, 1]} : vector<8x16xf32> to vector<1x16xf32>
    %111 = vector.extract_strided_slice %103 {offsets = [7, 0], sizes = [1, 16], strides = [1, 1]} : vector<8x16xf32> to vector<1x16xf32>
    %112 = tpu.concatenate %104, %105, %106, %107, %108, %109, %110, %111 in 1 : vector<1x16xf32>, vector<1x16xf32>, vector<1x16xf32>, vector<1x16xf32>, vector<1x16xf32>, vector<1x16xf32>, vector<1x16xf32>, vector<1x16xf32> -> vector<1x128xf32>
    %c8 = arith.constant 8 : index
    %c0_33 = arith.constant 0 : index
    %c0_34 = arith.constant 0 : index
    %113 = vector.load %arg1[%c8, %c0_33, %c0_34] : memref<16x4x16xbf16, #tpu.memory_space<vmem>>, vector<1x4x16xbf16>
    %114 = vector.shape_cast %113 : vector<1x4x16xbf16> to vector<4x16xbf16>
    %cst_35 = arith.constant dense<0.000000e+00> : vector<8x16xf32>
    %115 = tpu.matmul %0, %114, %cst_35 {dimension_numbers = #tpu.dot_dimension_numbers<[1], [0], [0], [1], [0, 0, 1, 1], [], []>} : vector<8x4xbf16>, vector<4x16xbf16>, vector<8x16xf32> -> vector<8x16xf32>
    %cst_36 = arith.constant 0.000000e+00 : f32
    %116 = vector.broadcast %cst_36 : f32 to vector<8x16xf32>
    %117 = arith.maximumf %115, %116 : vector<8x16xf32>
    %118 = vector.extract_strided_slice %117 {offsets = [0, 0], sizes = [1, 16], strides = [1, 1]} : vector<8x16xf32> to vector<1x16xf32>
    %119 = vector.extract_strided_slice %117 {offsets = [1, 0], sizes = [1, 16], strides = [1, 1]} : vector<8x16xf32> to vector<1x16xf32>
    %120 = vector.extract_strided_slice %117 {offsets = [2, 0], sizes = [1, 16], strides = [1, 1]} : vector<8x16xf32> to vector<1x16xf32>
    %121 = vector.extract_strided_slice %117 {offsets = [3, 0], sizes = [1, 16], strides = [1, 1]} : vector<8x16xf32> to vector<1x16xf32>
    %122 = vector.extract_strided_slice %117 {offsets = [4, 0], sizes = [1, 16], strides = [1, 1]} : vector<8x16xf32> to vector<1x16xf32>
    %123 = vector.extract_strided_slice %117 {offsets = [5, 0], sizes = [1, 16], strides = [1, 1]} : vector<8x16xf32> to vector<1x16xf32>
    %124 = vector.extract_strided_slice %117 {offsets = [6, 0], sizes = [1, 16], strides = [1, 1]} : vector<8x16xf32> to vector<1x16xf32>
    %125 = vector.extract_strided_slice %117 {offsets = [7, 0], sizes = [1, 16], strides = [1, 1]} : vector<8x16xf32> to vector<1x16xf32>
    %126 = tpu.concatenate %118, %119, %120, %121, %122, %123, %124, %125 in 1 : vector<1x16xf32>, vector<1x16xf32>, vector<1x16xf32>, vector<1x16xf32>, vector<1x16xf32>, vector<1x16xf32>, vector<1x16xf32>, vector<1x16xf32> -> vector<1x128xf32>
    %c9 = arith.constant 9 : index
    %c0_37 = arith.constant 0 : index
    %c0_38 = arith.constant 0 : index
    %127 = vector.load %arg1[%c9, %c0_37, %c0_38] : memref<16x4x16xbf16, #tpu.memory_space<vmem>>, vector<1x4x16xbf16>
    %128 = vector.shape_cast %127 : vector<1x4x16xbf16> to vector<4x16xbf16>
    %cst_39 = arith.constant dense<0.000000e+00> : vector<8x16xf32>
    %129 = tpu.matmul %0, %128, %cst_39 {dimension_numbers = #tpu.dot_dimension_numbers<[1], [0], [0], [1], [0, 0, 1, 1], [], []>} : vector<8x4xbf16>, vector<4x16xbf16>, vector<8x16xf32> -> vector<8x16xf32>
    %cst_40 = arith.constant 0.000000e+00 : f32
    %130 = vector.broadcast %cst_40 : f32 to vector<8x16xf32>
    %131 = arith.maximumf %129, %130 : vector<8x16xf32>
    %132 = vector.extract_strided_slice %131 {offsets = [0, 0], sizes = [1, 16], strides = [1, 1]} : vector<8x16xf32> to vector<1x16xf32>
    %133 = vector.extract_strided_slice %131 {offsets = [1, 0], sizes = [1, 16], strides = [1, 1]} : vector<8x16xf32> to vector<1x16xf32>
    %134 = vector.extract_strided_slice %131 {offsets = [2, 0], sizes = [1, 16], strides = [1, 1]} : vector<8x16xf32> to vector<1x16xf32>
    %135 = vector.extract_strided_slice %131 {offsets = [3, 0], sizes = [1, 16], strides = [1, 1]} : vector<8x16xf32> to vector<1x16xf32>
    %136 = vector.extract_strided_slice %131 {offsets = [4, 0], sizes = [1, 16], strides = [1, 1]} : vector<8x16xf32> to vector<1x16xf32>
    %137 = vector.extract_strided_slice %131 {offsets = [5, 0], sizes = [1, 16], strides = [1, 1]} : vector<8x16xf32> to vector<1x16xf32>
    %138 = vector.extract_strided_slice %131 {offsets = [6, 0], sizes = [1, 16], strides = [1, 1]} : vector<8x16xf32> to vector<1x16xf32>
    %139 = vector.extract_strided_slice %131 {offsets = [7, 0], sizes = [1, 16], strides = [1, 1]} : vector<8x16xf32> to vector<1x16xf32>
    %140 = tpu.concatenate %132, %133, %134, %135, %136, %137, %138, %139 in 1 : vector<1x16xf32>, vector<1x16xf32>, vector<1x16xf32>, vector<1x16xf32>, vector<1x16xf32>, vector<1x16xf32>, vector<1x16xf32>, vector<1x16xf32> -> vector<1x128xf32>
    %c10 = arith.constant 10 : index
    %c0_41 = arith.constant 0 : index
    %c0_42 = arith.constant 0 : index
    %141 = vector.load %arg1[%c10, %c0_41, %c0_42] : memref<16x4x16xbf16, #tpu.memory_space<vmem>>, vector<1x4x16xbf16>
    %142 = vector.shape_cast %141 : vector<1x4x16xbf16> to vector<4x16xbf16>
    %cst_43 = arith.constant dense<0.000000e+00> : vector<8x16xf32>
    %143 = tpu.matmul %0, %142, %cst_43 {dimension_numbers = #tpu.dot_dimension_numbers<[1], [0], [0], [1], [0, 0, 1, 1], [], []>} : vector<8x4xbf16>, vector<4x16xbf16>, vector<8x16xf32> -> vector<8x16xf32>
    %cst_44 = arith.constant 0.000000e+00 : f32
    %144 = vector.broadcast %cst_44 : f32 to vector<8x16xf32>
    %145 = arith.maximumf %143, %144 : vector<8x16xf32>
    %146 = vector.extract_strided_slice %145 {offsets = [0, 0], sizes = [1, 16], strides = [1, 1]} : vector<8x16xf32> to vector<1x16xf32>
    %147 = vector.extract_strided_slice %145 {offsets = [1, 0], sizes = [1, 16], strides = [1, 1]} : vector<8x16xf32> to vector<1x16xf32>
    %148 = vector.extract_strided_slice %145 {offsets = [2, 0], sizes = [1, 16], strides = [1, 1]} : vector<8x16xf32> to vector<1x16xf32>
    %149 = vector.extract_strided_slice %145 {offsets = [3, 0], sizes = [1, 16], strides = [1, 1]} : vector<8x16xf32> to vector<1x16xf32>
    %150 = vector.extract_strided_slice %145 {offsets = [4, 0], sizes = [1, 16], strides = [1, 1]} : vector<8x16xf32> to vector<1x16xf32>
    %151 = vector.extract_strided_slice %145 {offsets = [5, 0], sizes = [1, 16], strides = [1, 1]} : vector<8x16xf32> to vector<1x16xf32>
    %152 = vector.extract_strided_slice %145 {offsets = [6, 0], sizes = [1, 16], strides = [1, 1]} : vector<8x16xf32> to vector<1x16xf32>
    %153 = vector.extract_strided_slice %145 {offsets = [7, 0], sizes = [1, 16], strides = [1, 1]} : vector<8x16xf32> to vector<1x16xf32>
    %154 = tpu.concatenate %146, %147, %148, %149, %150, %151, %152, %153 in 1 : vector<1x16xf32>, vector<1x16xf32>, vector<1x16xf32>, vector<1x16xf32>, vector<1x16xf32>, vector<1x16xf32>, vector<1x16xf32>, vector<1x16xf32> -> vector<1x128xf32>
    %c11 = arith.constant 11 : index
    %c0_45 = arith.constant 0 : index
    %c0_46 = arith.constant 0 : index
    %155 = vector.load %arg1[%c11, %c0_45, %c0_46] : memref<16x4x16xbf16, #tpu.memory_space<vmem>>, vector<1x4x16xbf16>
    %156 = vector.shape_cast %155 : vector<1x4x16xbf16> to vector<4x16xbf16>
    %cst_47 = arith.constant dense<0.000000e+00> : vector<8x16xf32>
    %157 = tpu.matmul %0, %156, %cst_47 {dimension_numbers = #tpu.dot_dimension_numbers<[1], [0], [0], [1], [0, 0, 1, 1], [], []>} : vector<8x4xbf16>, vector<4x16xbf16>, vector<8x16xf32> -> vector<8x16xf32>
    %cst_48 = arith.constant 0.000000e+00 : f32
    %158 = vector.broadcast %cst_48 : f32 to vector<8x16xf32>
    %159 = arith.maximumf %157, %158 : vector<8x16xf32>
    %160 = vector.extract_strided_slice %159 {offsets = [0, 0], sizes = [1, 16], strides = [1, 1]} : vector<8x16xf32> to vector<1x16xf32>
    %161 = vector.extract_strided_slice %159 {offsets = [1, 0], sizes = [1, 16], strides = [1, 1]} : vector<8x16xf32> to vector<1x16xf32>
    %162 = vector.extract_strided_slice %159 {offsets = [2, 0], sizes = [1, 16], strides = [1, 1]} : vector<8x16xf32> to vector<1x16xf32>
    %163 = vector.extract_strided_slice %159 {offsets = [3, 0], sizes = [1, 16], strides = [1, 1]} : vector<8x16xf32> to vector<1x16xf32>
    %164 = vector.extract_strided_slice %159 {offsets = [4, 0], sizes = [1, 16], strides = [1, 1]} : vector<8x16xf32> to vector<1x16xf32>
    %165 = vector.extract_strided_slice %159 {offsets = [5, 0], sizes = [1, 16], strides = [1, 1]} : vector<8x16xf32> to vector<1x16xf32>
    %166 = vector.extract_strided_slice %159 {offsets = [6, 0], sizes = [1, 16], strides = [1, 1]} : vector<8x16xf32> to vector<1x16xf32>
    %167 = vector.extract_strided_slice %159 {offsets = [7, 0], sizes = [1, 16], strides = [1, 1]} : vector<8x16xf32> to vector<1x16xf32>
    %168 = tpu.concatenate %160, %161, %162, %163, %164, %165, %166, %167 in 1 : vector<1x16xf32>, vector<1x16xf32>, vector<1x16xf32>, vector<1x16xf32>, vector<1x16xf32>, vector<1x16xf32>, vector<1x16xf32>, vector<1x16xf32> -> vector<1x128xf32>
    %c12 = arith.constant 12 : index
    %c0_49 = arith.constant 0 : index
    %c0_50 = arith.constant 0 : index
    %169 = vector.load %arg1[%c12, %c0_49, %c0_50] : memref<16x4x16xbf16, #tpu.memory_space<vmem>>, vector<1x4x16xbf16>
    %170 = vector.shape_cast %169 : vector<1x4x16xbf16> to vector<4x16xbf16>
    %cst_51 = arith.constant dense<0.000000e+00> : vector<8x16xf32>
    %171 = tpu.matmul %0, %170, %cst_51 {dimension_numbers = #tpu.dot_dimension_numbers<[1], [0], [0], [1], [0, 0, 1, 1], [], []>} : vector<8x4xbf16>, vector<4x16xbf16>, vector<8x16xf32> -> vector<8x16xf32>
    %cst_52 = arith.constant 0.000000e+00 : f32
    %172 = vector.broadcast %cst_52 : f32 to vector<8x16xf32>
    %173 = arith.maximumf %171, %172 : vector<8x16xf32>
    %174 = vector.extract_strided_slice %173 {offsets = [0, 0], sizes = [1, 16], strides = [1, 1]} : vector<8x16xf32> to vector<1x16xf32>
    %175 = vector.extract_strided_slice %173 {offsets = [1, 0], sizes = [1, 16], strides = [1, 1]} : vector<8x16xf32> to vector<1x16xf32>
    %176 = vector.extract_strided_slice %173 {offsets = [2, 0], sizes = [1, 16], strides = [1, 1]} : vector<8x16xf32> to vector<1x16xf32>
    %177 = vector.extract_strided_slice %173 {offsets = [3, 0], sizes = [1, 16], strides = [1, 1]} : vector<8x16xf32> to vector<1x16xf32>
    %178 = vector.extract_strided_slice %173 {offsets = [4, 0], sizes = [1, 16], strides = [1, 1]} : vector<8x16xf32> to vector<1x16xf32>
    %179 = vector.extract_strided_slice %173 {offsets = [5, 0], sizes = [1, 16], strides = [1, 1]} : vector<8x16xf32> to vector<1x16xf32>
    %180 = vector.extract_strided_slice %173 {offsets = [6, 0], sizes = [1, 16], strides = [1, 1]} : vector<8x16xf32> to vector<1x16xf32>
    %181 = vector.extract_strided_slice %173 {offsets = [7, 0], sizes = [1, 16], strides = [1, 1]} : vector<8x16xf32> to vector<1x16xf32>
    %182 = tpu.concatenate %174, %175, %176, %177, %178, %179, %180, %181 in 1 : vector<1x16xf32>, vector<1x16xf32>, vector<1x16xf32>, vector<1x16xf32>, vector<1x16xf32>, vector<1x16xf32>, vector<1x16xf32>, vector<1x16xf32> -> vector<1x128xf32>
    %c13 = arith.constant 13 : index
    %c0_53 = arith.constant 0 : index
    %c0_54 = arith.constant 0 : index
    %183 = vector.load %arg1[%c13, %c0_53, %c0_54] : memref<16x4x16xbf16, #tpu.memory_space<vmem>>, vector<1x4x16xbf16>
    %184 = vector.shape_cast %183 : vector<1x4x16xbf16> to vector<4x16xbf16>
    %cst_55 = arith.constant dense<0.000000e+00> : vector<8x16xf32>
    %185 = tpu.matmul %0, %184, %cst_55 {dimension_numbers = #tpu.dot_dimension_numbers<[1], [0], [0], [1], [0, 0, 1, 1], [], []>} : vector<8x4xbf16>, vector<4x16xbf16>, vector<8x16xf32> -> vector<8x16xf32>
    %cst_56 = arith.constant 0.000000e+00 : f32
    %186 = vector.broadcast %cst_56 : f32 to vector<8x16xf32>
    %187 = arith.maximumf %185, %186 : vector<8x16xf32>
    %188 = vector.extract_strided_slice %187 {offsets = [0, 0], sizes = [1, 16], strides = [1, 1]} : vector<8x16xf32> to vector<1x16xf32>
    %189 = vector.extract_strided_slice %187 {offsets = [1, 0], sizes = [1, 16], strides = [1, 1]} : vector<8x16xf32> to vector<1x16xf32>
    %190 = vector.extract_strided_slice %187 {offsets = [2, 0], sizes = [1, 16], strides = [1, 1]} : vector<8x16xf32> to vector<1x16xf32>
    %191 = vector.extract_strided_slice %187 {offsets = [3, 0], sizes = [1, 16], strides = [1, 1]} : vector<8x16xf32> to vector<1x16xf32>
    %192 = vector.extract_strided_slice %187 {offsets = [4, 0], sizes = [1, 16], strides = [1, 1]} : vector<8x16xf32> to vector<1x16xf32>
    %193 = vector.extract_strided_slice %187 {offsets = [5, 0], sizes = [1, 16], strides = [1, 1]} : vector<8x16xf32> to vector<1x16xf32>
    %194 = vector.extract_strided_slice %187 {offsets = [6, 0], sizes = [1, 16], strides = [1, 1]} : vector<8x16xf32> to vector<1x16xf32>
    %195 = vector.extract_strided_slice %187 {offsets = [7, 0], sizes = [1, 16], strides = [1, 1]} : vector<8x16xf32> to vector<1x16xf32>
    %196 = tpu.concatenate %188, %189, %190, %191, %192, %193, %194, %195 in 1 : vector<1x16xf32>, vector<1x16xf32>, vector<1x16xf32>, vector<1x16xf32>, vector<1x16xf32>, vector<1x16xf32>, vector<1x16xf32>, vector<1x16xf32> -> vector<1x128xf32>
    %c14 = arith.constant 14 : index
    %c0_57 = arith.constant 0 : index
    %c0_58 = arith.constant 0 : index
    %197 = vector.load %arg1[%c14, %c0_57, %c0_58] : memref<16x4x16xbf16, #tpu.memory_space<vmem>>, vector<1x4x16xbf16>
    %198 = vector.shape_cast %197 : vector<1x4x16xbf16> to vector<4x16xbf16>
    %cst_59 = arith.constant dense<0.000000e+00> : vector<8x16xf32>
    %199 = tpu.matmul %0, %198, %cst_59 {dimension_numbers = #tpu.dot_dimension_numbers<[1], [0], [0], [1], [0, 0, 1, 1], [], []>} : vector<8x4xbf16>, vector<4x16xbf16>, vector<8x16xf32> -> vector<8x16xf32>
    %cst_60 = arith.constant 0.000000e+00 : f32
    %200 = vector.broadcast %cst_60 : f32 to vector<8x16xf32>
    %201 = arith.maximumf %199, %200 : vector<8x16xf32>
    %202 = vector.extract_strided_slice %201 {offsets = [0, 0], sizes = [1, 16], strides = [1, 1]} : vector<8x16xf32> to vector<1x16xf32>
    %203 = vector.extract_strided_slice %201 {offsets = [1, 0], sizes = [1, 16], strides = [1, 1]} : vector<8x16xf32> to vector<1x16xf32>
    %204 = vector.extract_strided_slice %201 {offsets = [2, 0], sizes = [1, 16], strides = [1, 1]} : vector<8x16xf32> to vector<1x16xf32>
    %205 = vector.extract_strided_slice %201 {offsets = [3, 0], sizes = [1, 16], strides = [1, 1]} : vector<8x16xf32> to vector<1x16xf32>
    %206 = vector.extract_strided_slice %201 {offsets = [4, 0], sizes = [1, 16], strides = [1, 1]} : vector<8x16xf32> to vector<1x16xf32>
    %207 = vector.extract_strided_slice %201 {offsets = [5, 0], sizes = [1, 16], strides = [1, 1]} : vector<8x16xf32> to vector<1x16xf32>
    %208 = vector.extract_strided_slice %201 {offsets = [6, 0], sizes = [1, 16], strides = [1, 1]} : vector<8x16xf32> to vector<1x16xf32>
    %209 = vector.extract_strided_slice %201 {offsets = [7, 0], sizes = [1, 16], strides = [1, 1]} : vector<8x16xf32> to vector<1x16xf32>
    %210 = tpu.concatenate %202, %203, %204, %205, %206, %207, %208, %209 in 1 : vector<1x16xf32>, vector<1x16xf32>, vector<1x16xf32>, vector<1x16xf32>, vector<1x16xf32>, vector<1x16xf32>, vector<1x16xf32>, vector<1x16xf32> -> vector<1x128xf32>
    %c15 = arith.constant 15 : index
    %c0_61 = arith.constant 0 : index
    %c0_62 = arith.constant 0 : index
    %211 = vector.load %arg1[%c15, %c0_61, %c0_62] : memref<16x4x16xbf16, #tpu.memory_space<vmem>>, vector<1x4x16xbf16>
    %212 = vector.shape_cast %211 : vector<1x4x16xbf16> to vector<4x16xbf16>
    %cst_63 = arith.constant dense<0.000000e+00> : vector<8x16xf32>
    %213 = tpu.matmul %0, %212, %cst_63 {dimension_numbers = #tpu.dot_dimension_numbers<[1], [0], [0], [1], [0, 0, 1, 1], [], []>} : vector<8x4xbf16>, vector<4x16xbf16>, vector<8x16xf32> -> vector<8x16xf32>
    %cst_64 = arith.constant 0.000000e+00 : f32
    %214 = vector.broadcast %cst_64 : f32 to vector<8x16xf32>
    %215 = arith.maximumf %213, %214 : vector<8x16xf32>
    %216 = vector.extract_strided_slice %215 {offsets = [0, 0], sizes = [1, 16], strides = [1, 1]} : vector<8x16xf32> to vector<1x16xf32>
    %217 = vector.extract_strided_slice %215 {offsets = [1, 0], sizes = [1, 16], strides = [1, 1]} : vector<8x16xf32> to vector<1x16xf32>
    %218 = vector.extract_strided_slice %215 {offsets = [2, 0], sizes = [1, 16], strides = [1, 1]} : vector<8x16xf32> to vector<1x16xf32>
    %219 = vector.extract_strided_slice %215 {offsets = [3, 0], sizes = [1, 16], strides = [1, 1]} : vector<8x16xf32> to vector<1x16xf32>
    %220 = vector.extract_strided_slice %215 {offsets = [4, 0], sizes = [1, 16], strides = [1, 1]} : vector<8x16xf32> to vector<1x16xf32>
    %221 = vector.extract_strided_slice %215 {offsets = [5, 0], sizes = [1, 16], strides = [1, 1]} : vector<8x16xf32> to vector<1x16xf32>
    %222 = vector.extract_strided_slice %215 {offsets = [6, 0], sizes = [1, 16], strides = [1, 1]} : vector<8x16xf32> to vector<1x16xf32>
    %223 = vector.extract_strided_slice %215 {offsets = [7, 0], sizes = [1, 16], strides = [1, 1]} : vector<8x16xf32> to vector<1x16xf32>
    %224 = tpu.concatenate %216, %217, %218, %219, %220, %221, %222, %223 in 1 : vector<1x16xf32>, vector<1x16xf32>, vector<1x16xf32>, vector<1x16xf32>, vector<1x16xf32>, vector<1x16xf32>, vector<1x16xf32>, vector<1x16xf32> -> vector<1x128xf32>
    %225 = tpu.concatenate %14, %28, %42, %56, %70, %84, %98, %112, %126, %140, %154, %168, %182, %196, %210, %224 in 0 : vector<1x128xf32>, vector<1x128xf32>, vector<1x128xf32>, vector<1x128xf32>, vector<1x128xf32>, vector<1x128xf32>, vector<1x128xf32>, vector<1x128xf32>, vector<1x128xf32>, vector<1x128xf32>, vector<1x128xf32>, vector<1x128xf32>, vector<1x128xf32>, vector<1x128xf32>, vector<1x128xf32>, vector<1x128xf32> -> vector<16x128xf32>
    %226 = arith.truncf %225 : vector<16x128xf32> to vector<16x128xbf16>
    %c0_65 = arith.constant 0 : index
    %c0_66 = arith.constant 0 : index
    %227 = vector.load %arg3[%c0_65, %c0_66] : memref<16x128xbf16, #tpu.memory_space<vmem>>, vector<16x128xbf16>
    tpu.vector_store %arg3[%c0_65, %c0_66], %226 {strides = array<i32>} : memref<16x128xbf16, #tpu.memory_space<vmem>>, vector<16x128xbf16>,
    return
  }
  func.func @transform_0(%arg0: i32) -> (i32, i32, i32) {
    %c0_i32 = arith.constant 0 : i32
    %c0_i32_0 = arith.constant 0 : i32
    %c0_i32_1 = arith.constant 0 : i32
    return %arg0, %c0_i32, %c0_i32_0 : i32, i32, i32
  }
  func.func @transform_1(%arg0: i32) -> (i32, i32) {
    %c0_i32 = arith.constant 0 : i32
    %c0_i32_0 = arith.constant 0 : i32
    %c0_i32_1 = arith.constant 0 : i32
    return %c0_i32, %c0_i32_0 : i32, i32
  }
  func.func @transform_2(%arg0: i32) -> (i32, i32) {
    %c0_i32 = arith.constant 0 : i32
    %c0_i32_0 = arith.constant 0 : i32
    return %arg0, %c0_i32 : i32, i32
  }
}

</mosaic_0001>

<llo_original>
// kernel: tpu_custom_call.1
$region0: #{tpu_custom_call.1}
  #allocation0 [shape = 'u32[]', space=smem, size = 0x4, offset = 0x4, fixed_abs, tag = 'smem constant byte address 0x4 - core index']
  #allocation1 [shape = 'u32[144,128]{1,0:T(1,128)}', space=vmem, size = 0x12000, scoped, tag = 'internal scratch']
  %s0 = inlined_call_operand.hbm [shape: bf16[16,4,16], index: 0, kind: input, shape index: {}]
  %s1 = inlined_call_operand.vmem [shape: bf16[8,4], index: 1, kind: input, shape index: {}]
  %s2 = inlined_call_operand.hbm [shape: bf16[16,128], index: 2, kind: output, shape index: {}]
  %s3 = sld [smem:[#allocation0]]
  $region22: #{tpu_custom_call.1} parent=0
    _
  %s5 = ssub.s32 1, %s3
  %s6 = scalar_select 0, %s5, %s3
  $region1: #{tpu_custom_call.1} parent=0
    #allocation2 [shape = 'u8[16384]{0}', space=vmem, size = 0x4000, scoped, tag = 'input window, operand 0, single buffered']
    #allocation3 [shape = 's32[1]{0}', space=sflag, size = 0x4, scoped, tag = 'scoped memory for tpu_custom_call.1']
    #allocation4 [shape = 's32[1]{0}', space=sflag, size = 0x4, scoped, tag = 'scoped memory for tpu_custom_call.1']
    #allocation5 [shape = 'u8[4096]{0}', space=vmem, size = 0x1000, scoped, tag = 'output window, operand 0, single buffered']
    %7 = vsyncpa [#allocation3], 0
    %8 = vsyncpa [#allocation4], 0
    // Predicated region
    $region2: #{tpu_custom_call.1} parent=1 // pred_check
      _
    $region3: #{tpu_custom_call.1} parent=1 // pred_check_branch
      %10 = sbr.rel (0) target = $region5
    $region4: #{tpu_custom_call.1} parent=1 // pred_region
      %s12 = ssub.s32 512, 512
      %13 = vsyncadd [#allocation3], %s12
      %s14 = sshll.u32 [#allocation2], 4
      %s15 = int_to_ptr.vmem [resolvable:$true] %s14
      %20 = dma.hbm_to_vmem [thread:$0]  %s0, 512, %s15, [#allocation3], 32, 32, 2
    $region5: #{tpu_custom_call.1} parent=1 // pred_fallthru
      _
    // Predicated region
    $region6: #{tpu_custom_call.1} parent=1 // pred_check
      _
    $region7: #{tpu_custom_call.1} parent=1 // pred_check_branch
      %22 = sbr.rel (0) target = $region9
    $region8: #{tpu_custom_call.1} parent=1 // pred_region
      _
    $region9: #{tpu_custom_call.1} parent=1 // pred_fallthru
      _
    // Predicated region
    $region10: #{tpu_custom_call.1} parent=1 // pred_check
      _
    $region11: #{tpu_custom_call.1} parent=1 // pred_check_branch
      %24 = sbr.rel (0) target = $region13
    $region12: #{tpu_custom_call.1} parent=1 // pred_region
      %25 = dma.done [#allocation3], 512
    $region13: #{tpu_custom_call.1} parent=1 // pred_fallthru
      _
    %v27 = vld [vmem:[%s1] sm:$0xf]
    %v28 = vld [vmem:[#allocation2] sm:$0x3]
    %vm29 = vcmask 31744
    %v31 = vsel %vm29, %v27, 0
    %vm33 = vcmask 1041408
    %v35 = vsel %vm33, %v28, 0
    %37 = vmatprep.subr.bf16.mxu0 0
    %38 = vmatpush1.bf16.msra.mxu0 0
    %39 = vmatprep.subr.bf16.mxu0 0
    %40 = vmatpush1.bf16.msra.mxu0 0
    %41 = vmatprep.subr.bf16.mxu0 0
    %42 = vmatpush1.bf16.msra.mxu0 0
    %43 = vmatprep.subr.bf16.mxu0 0
    %44 = vmatpush1.bf16.msra.mxu0 0
    %45 = vmatprep.subr.bf16.mxu0 0
    %46 = vmatpush1.bf16.msra.mxu0 0
    %47 = vmatprep.subr.bf16.mxu0 0
    %48 = vmatpush1.bf16.msra.mxu0 0
    %49 = vmatprep.subr.bf16.mxu0 0
    %50 = vmatpush1.bf16.msra.mxu0 0
    %51 = vmatprep.subr.bf16.mxu0 0
    %52 = vmatpush1.bf16.msra.mxu0 %v35
    %53 = vmatprep.subr.bf16.mxu0 0
    %54 = vmatpush2.bf16.msra.mxu0 0
    %55 = vmatprep.subr.bf16.mxu0 0
    %56 = vmatpush2.bf16.msra.mxu0 0
    %57 = vmatprep.subr.bf16.mxu0 0
    %58 = vmatpush2.bf16.msra.mxu0 0
    %59 = vmatprep.subr.bf16.mxu0 0
    %60 = vmatpush2.bf16.msra.mxu0 0
    %61 = vmatprep.subr.bf16.mxu0 0
    %62 = vmatpush2.bf16.msra.mxu0 0
    %63 = vmatprep.subr.bf16.mxu0 0
    %64 = vmatpush2.bf16.msra.mxu0 0
    %65 = vmatprep.subr.bf16.mxu0 0
    %66 = vmatpush2.bf16.msra.mxu0 0
    %67 = vmatprep.subr.bf16.mxu0 0
    %68 = vmatpush2.bf16.msra.mxu0 0
    %69 = vmatprep.mubr.bf16.mxu0 0
    %70 = vmatmul.mubr.bf16.gmra.mxu0 %v31
    %v71 = vpop.f32.mrf.mxu0
    %v72 = vadd.f32 0.0, %v71
    %v73 = vpop.f32.mrf.mxu0
    %v74 = vpop.f32.mrf.mxu0
    %v75 = vpop.f32.mrf.mxu0
    %76 = vdwg.mxu0
    %v77 = vmax.f32 %v72, 0.0
    %v79 = vrot.slane %v77, 1
    %80 = vrot.lane.b32.xlu0 %v79, 16
    %v81 = vpop.permute.xlu0 %80
    %v83 = vrot.slane %v77, 2
    %84 = vrot.lane.b32.xlu0 %v83, 32
    %v85 = vpop.permute.xlu0 %84
    %v87 = vrot.slane %v77, 3
    %88 = vrot.lane.b32.xlu0 %v87, 48
    %v89 = vpop.permute.xlu0 %88
    %v91 = vrot.slane %v77, 4
    %92 = vrot.lane.b32.xlu0 %v91, 64
    %v93 = vpop.permute.xlu0 %92
    %v95 = vrot.slane %v77, 5
    %96 = vrot.lane.b32.xlu0 %v95, 80
    %v97 = vpop.permute.xlu0 %96
    %v99 = vrot.slane %v77, 6
    %100 = vrot.lane.b32.xlu0 %v99, 96
    %v101 = vpop.permute.xlu0 %100
    %v103 = vrot.slane %v77, 7
    %104 = vrot.lane.b32.xlu0 %v103, 112
    %v105 = vpop.permute.xlu0 %104
    %vm107 = vcmask 130048
    %v108 = vsel %vm107, %v77, %v81
    %vm109 = vcmask 261120
    %v110 = vsel %vm109, %v108, %v85
    %vm111 = vcmask 392192
    %v112 = vsel %vm111, %v110, %v89
    %vm113 = vcmask 523264
    %v114 = vsel %vm113, %v112, %v93
    %vm115 = vcmask 654336
    %v116 = vsel %vm115, %v114, %v97
    %vm117 = vcmask 785408
    %v118 = vsel %vm117, %v116, %v101
    %vm119 = vcmask 916480
    %v120 = vsel %vm119, %v118, %v105
    %s121 = scalar_lea.vmem [#allocation2], 2
    %v122 = vld [vmem:[%s121] sm:$0x3]
    %v124 = vsel %vm33, %v122, 0
    %126 = vmatprep.subr.bf16.mxu0 0
    %127 = vmatpush1.bf16.msra.mxu0 0
    %128 = vmatprep.subr.bf16.mxu0 0
    %129 = vmatpush1.bf16.msra.mxu0 0
    %130 = vmatprep.subr.bf16.mxu0 0
    %131 = vmatpush1.bf16.msra.mxu0 0
    %132 = vmatprep.subr.bf16.mxu0 0
    %133 = vmatpush1.bf16.msra.mxu0 0
    %134 = vmatprep.subr.bf16.mxu0 0
    %135 = vmatpush1.bf16.msra.mxu0 0
    %136 = vmatprep.subr.bf16.mxu0 0
    %137 = vmatpush1.bf16.msra.mxu0 0
    %138 = vmatprep.subr.bf16.mxu0 0
    %139 = vmatpush1.bf16.msra.mxu0 0
    %140 = vmatprep.subr.bf16.mxu0 0
    %141 = vmatpush1.bf16.msra.mxu0 %v124
    %142 = vmatprep.subr.bf16.mxu0 0
    %143 = vmatpush2.bf16.msra.mxu0 0
    %144 = vmatprep.subr.bf16.mxu0 0
    %145 = vmatpush2.bf16.msra.mxu0 0
    %146 = vmatprep.subr.bf16.mxu0 0
    %147 = vmatpush2.bf16.msra.mxu0 0
    %148 = vmatprep.subr.bf16.mxu0 0
    %149 = vmatpush2.bf16.msra.mxu0 0
    %150 = vmatprep.subr.bf16.mxu0 0
    %151 = vmatpush2.bf16.msra.mxu0 0
    %152 = vmatprep.subr.bf16.mxu0 0
    %153 = vmatpush2.bf16.msra.mxu0 0
    %154 = vmatprep.subr.bf16.mxu0 0
    %155 = vmatpush2.bf16.msra.mxu0 0
    %156 = vmatprep.subr.bf16.mxu0 0
    %157 = vmatpush2.bf16.msra.mxu0 0
    %158 = vmatprep.mubr.bf16.mxu0 0
    %159 = vmatmul.mubr.bf16.gmra.mxu0 %v31
    %v160 = vpop.f32.mrf.mxu0
    %v161 = vadd.f32 0.0, %v160
    %v162 = vpop.f32.mrf.mxu0
    %v163 = vpop.f32.mrf.mxu0
    %v164 = vpop.f32.mrf.mxu0
    %165 = vdwg.mxu0
    %v166 = vmax.f32 %v161, 0.0
    %v168 = vrot.slane %v166, 1
    %169 = vrot.lane.b32.xlu0 %v168, 16
    %v170 = vpop.permute.xlu0 %169
    %v172 = vrot.slane %v166, 2
    %173 = vrot.lane.b32.xlu0 %v172, 32
    %v174 = vpop.permute.xlu0 %173
    %v176 = vrot.slane %v166, 3
    %177 = vrot.lane.b32.xlu0 %v176, 48
    %v178 = vpop.permute.xlu0 %177
    %v180 = vrot.slane %v166, 4
    %181 = vrot.lane.b32.xlu0 %v180, 64
    %v182 = vpop.permute.xlu0 %181
    %v184 = vrot.slane %v166, 5
    %185 = vrot.lane.b32.xlu0 %v184, 80
    %v186 = vpop.permute.xlu0 %185
    %v188 = vrot.slane %v166, 6
    %189 = vrot.lane.b32.xlu0 %v188, 96
    %v190 = vpop.permute.xlu0 %189
    %v192 = vrot.slane %v166, 7
    %193 = vrot.lane.b32.xlu0 %v192, 112
    %v194 = vpop.permute.xlu0 %193
    %v196 = vsel %vm107, %v166, %v170
    %v197 = vsel %vm109, %v196, %v174
    %v198 = vsel %vm111, %v197, %v178
    %v199 = vsel %vm113, %v198, %v182
    %v200 = vsel %vm115, %v199, %v186
    %v201 = vsel %vm117, %v200, %v190
    %v202 = vsel %vm119, %v201, %v194
    %s203 = scalar_lea.vmem [#allocation2], 4
    %v204 = vld [vmem:[%s203] sm:$0x3]
    %v206 = vsel %vm33, %v204, 0
    %208 = vmatprep.subr.bf16.mxu0 0
    %209 = vmatpush1.bf16.msra.mxu0 0
    %210 = vmatprep.subr.bf16.mxu0 0
    %211 = vmatpush1.bf16.msra.mxu0 0
    %212 = vmatprep.subr.bf16.mxu0 0
    %213 = vmatpush1.bf16.msra.mxu0 0
    %214 = vmatprep.subr.bf16.mxu0 0
    %215 = vmatpush1.bf16.msra.mxu0 0
    %216 = vmatprep.subr.bf16.mxu0 0
    %217 = vmatpush1.bf16.msra.mxu0 0
    %218 = vmatprep.subr.bf16.mxu0 0
    %219 = vmatpush1.bf16.msra.mxu0 0
    %220 = vmatprep.subr.bf16.mxu0 0
    %221 = vmatpush1.bf16.msra.mxu0 0
    %222 = vmatprep.subr.bf16.mxu0 0
    %223 = vmatpush1.bf16.msra.mxu0 %v206
    %224 = vmatprep.subr.bf16.mxu0 0
    %225 = vmatpush2.bf16.msra.mxu0 0
    %226 = vmatprep.subr.bf16.mxu0 0
    %227 = vmatpush2.bf16.msra.mxu0 0
    %228 = vmatprep.subr.bf16.mxu0 0
    %229 = vmatpush2.bf16.msra.mxu0 0
    %230 = vmatprep.subr.bf16.mxu0 0
    %231 = vmatpush2.bf16.msra.mxu0 0
    %232 = vmatprep.subr.bf16.mxu0 0
    %233 = vmatpush2.bf16.msra.mxu0 0
    %234 = vmatprep.subr.bf16.mxu0 0
    %235 = vmatpush2.bf16.msra.mxu0 0
    %236 = vmatprep.subr.bf16.mxu0 0
    %237 = vmatpush2.bf16.msra.mxu0 0
    %238 = vmatprep.subr.bf16.mxu0 0
    %239 = vmatpush2.bf16.msra.mxu0 0
    %240 = vmatprep.mubr.bf16.mxu0 0
    %241 = vmatmul.mubr.bf16.gmra.mxu0 %v31
    %v242 = vpop.f32.mrf.mxu0
    %v243 = vadd.f32 0.0, %v242
    %v244 = vpop.f32.mrf.mxu0
    %v245 = vpop.f32.mrf.mxu0
    %v246 = vpop.f32.mrf.mxu0
    %247 = vdwg.mxu0
    %v248 = vmax.f32 %v243, 0.0
    %v250 = vrot.slane %v248, 1
    %251 = vrot.lane.b32.xlu0 %v250, 16
    %v252 = vpop.permute.xlu0 %251
    %v254 = vrot.slane %v248, 2
    %255 = vrot.lane.b32.xlu0 %v254, 32
    %v256 = vpop.permute.xlu0 %255
    %v258 = vrot.slane %v248, 3
    %259 = vrot.lane.b32.xlu0 %v258, 48
    %v260 = vpop.permute.xlu0 %259
    %v262 = vrot.slane %v248, 4
    %263 = vrot.lane.b32.xlu0 %v262, 64
    %v264 = vpop.permute.xlu0 %263
    %v266 = vrot.slane %v248, 5
    %267 = vrot.lane.b32.xlu0 %v266, 80
    %v268 = vpop.permute.xlu0 %267
    %v270 = vrot.slane %v248, 6
    %271 = vrot.lane.b32.xlu0 %v270, 96
    %v272 = vpop.permute.xlu0 %271
    %v274 = vrot.slane %v248, 7
    %275 = vrot.lane.b32.xlu0 %v274, 112
    %v276 = vpop.permute.xlu0 %275
    %v278 = vsel %vm107, %v248, %v252
    %v279 = vsel %vm109, %v278, %v256
    %v280 = vsel %vm111, %v279, %v260
    %v281 = vsel %vm113, %v280, %v264
    %v282 = vsel %vm115, %v281, %v268
    %v283 = vsel %vm117, %v282, %v272
    %v284 = vsel %vm119, %v283, %v276
    %s285 = scalar_lea.vmem [#allocation2], 6
    %v286 = vld [vmem:[%s285] sm:$0x3]
    %v288 = vsel %vm33, %v286, 0
    %290 = vmatprep.subr.bf16.mxu0 0
    %291 = vmatpush1.bf16.msra.mxu0 0
    %292 = vmatprep.subr.bf16.mxu0 0
    %293 = vmatpush1.bf16.msra.mxu0 0
    %294 = vmatprep.subr.bf16.mxu0 0
    %295 = vmatpush1.bf16.msra.mxu0 0
    %296 = vmatprep.subr.bf16.mxu0 0
    %297 = vmatpush1.bf16.msra.mxu0 0
    %298 = vmatprep.subr.bf16.mxu0 0
    %299 = vmatpush1.bf16.msra.mxu0 0
    %300 = vmatprep.subr.bf16.mxu0 0
    %301 = vmatpush1.bf16.msra.mxu0 0
    %302 = vmatprep.subr.bf16.mxu0 0
    %303 = vmatpush1.bf16.msra.mxu0 0
    %304 = vmatprep.subr.bf16.mxu0 0
    %305 = vmatpush1.bf16.msra.mxu0 %v288
    %306 = vmatprep.subr.bf16.mxu0 0
    %307 = vmatpush2.bf16.msra.mxu0 0
    %308 = vmatprep.subr.bf16.mxu0 0
    %309 = vmatpush2.bf16.msra.mxu0 0
    %310 = vmatprep.subr.bf16.mxu0 0
    %311 = vmatpush2.bf16.msra.mxu0 0
    %312 = vmatprep.subr.bf16.mxu0 0
    %313 = vmatpush2.bf16.msra.mxu0 0
    %314 = vmatprep.subr.bf16.mxu0 0
    %315 = vmatpush2.bf16.msra.mxu0 0
    %316 = vmatprep.subr.bf16.mxu0 0
    %317 = vmatpush2.bf16.msra.mxu0 0
    %318 = vmatprep.subr.bf16.mxu0 0
    %319 = vmatpush2.bf16.msra.mxu0 0
    %320 = vmatprep.subr.bf16.mxu0 0
    %321 = vmatpush2.bf16.msra.mxu0 0
    %322 = vmatprep.mubr.bf16.mxu0 0
    %323 = vmatmul.mubr.bf16.gmra.mxu0 %v31
    %v324 = vpop.f32.mrf.mxu0
    %v325 = vadd.f32 0.0, %v324
    %v326 = vpop.f32.mrf.mxu0
    %v327 = vpop.f32.mrf.mxu0
    %v328 = vpop.f32.mrf.mxu0
    %329 = vdwg.mxu0
    %v330 = vmax.f32 %v325, 0.0
    %v332 = vrot.slane %v330, 1
    %333 = vrot.lane.b32.xlu0 %v332, 16
    %v334 = vpop.permute.xlu0 %333
    %v336 = vrot.slane %v330, 2
    %337 = vrot.lane.b32.xlu0 %v336, 32
    %v338 = vpop.permute.xlu0 %337
    %v340 = vrot.slane %v330, 3
    %341 = vrot.lane.b32.xlu0 %v340, 48
    %v342 = vpop.permute.xlu0 %341
    %v344 = vrot.slane %v330, 4
    %345 = vrot.lane.b32.xlu0 %v344, 64
    %v346 = vpop.permute.xlu0 %345
    %v348 = vrot.slane %v330, 5
    %349 = vrot.lane.b32.xlu0 %v348, 80
    %v350 = vpop.permute.xlu0 %349
    %v352 = vrot.slane %v330, 6
    %353 = vrot.lane.b32.xlu0 %v352, 96
    %v354 = vpop.permute.xlu0 %353
    %v356 = vrot.slane %v330, 7
    %357 = vrot.lane.b32.xlu0 %v356, 112
    %v358 = vpop.permute.xlu0 %357
    %v360 = vsel %vm107, %v330, %v334
    %v361 = vsel %vm109, %v360, %v338
    %v362 = vsel %vm111, %v361, %v342
    %v363 = vsel %vm113, %v362, %v346
    %v364 = vsel %vm115, %v363, %v350
    %v365 = vsel %vm117, %v364, %v354
    %v366 = vsel %vm119, %v365, %v358
    %s367 = scalar_lea.vmem [#allocation2], 8
    %v368 = vld [vmem:[%s367] sm:$0x3]
    %v370 = vsel %vm33, %v368, 0
    %372 = vmatprep.subr.bf16.mxu0 0
    %373 = vmatpush1.bf16.msra.mxu0 0
    %374 = vmatprep.subr.bf16.mxu0 0
    %375 = vmatpush1.bf16.msra.mxu0 0
    %376 = vmatprep.subr.bf16.mxu0 0
    %377 = vmatpush1.bf16.msra.mxu0 0
    %378 = vmatprep.subr.bf16.mxu0 0
    %379 = vmatpush1.bf16.msra.mxu0 0
    %380 = vmatprep.subr.bf16.mxu0 0
    %381 = vmatpush1.bf16.msra.mxu0 0
    %382 = vmatprep.subr.bf16.mxu0 0
    %383 = vmatpush1.bf16.msra.mxu0 0
    %384 = vmatprep.subr.bf16.mxu0 0
    %385 = vmatpush1.bf16.msra.mxu0 0
    %386 = vmatprep.subr.bf16.mxu0 0
    %387 = vmatpush1.bf16.msra.mxu0 %v370
    %388 = vmatprep.subr.bf16.mxu0 0
    %389 = vmatpush2.bf16.msra.mxu0 0
    %390 = vmatprep.subr.bf16.mxu0 0
    %391 = vmatpush2.bf16.msra.mxu0 0
    %392 = vmatprep.subr.bf16.mxu0 0
    %393 = vmatpush2.bf16.msra.mxu0 0
    %394 = vmatprep.subr.bf16.mxu0 0
    %395 = vmatpush2.bf16.msra.mxu0 0
    %396 = vmatprep.subr.bf16.mxu0 0
    %397 = vmatpush2.bf16.msra.mxu0 0
    %398 = vmatprep.subr.bf16.mxu0 0
    %399 = vmatpush2.bf16.msra.mxu0 0
    %400 = vmatprep.subr.bf16.mxu0 0
    %401 = vmatpush2.bf16.msra.mxu0 0
    %402 = vmatprep.subr.bf16.mxu0 0
    %403 = vmatpush2.bf16.msra.mxu0 0
    %404 = vmatprep.mubr.bf16.mxu0 0
    %405 = vmatmul.mubr.bf16.gmra.mxu0 %v31
    %v406 = vpop.f32.mrf.mxu0
    %v407 = vadd.f32 0.0, %v406
    %v408 = vpop.f32.mrf.mxu0
    %v409 = vpop.f32.mrf.mxu0
    %v410 = vpop.f32.mrf.mxu0
    %411 = vdwg.mxu0
    %v412 = vmax.f32 %v407, 0.0
    %v414 = vrot.slane %v412, 1
    %415 = vrot.lane.b32.xlu0 %v414, 16
    %v416 = vpop.permute.xlu0 %415
    %v418 = vrot.slane %v412, 2
    %419 = vrot.lane.b32.xlu0 %v418, 32
    %v420 = vpop.permute.xlu0 %419
    %v422 = vrot.slane %v412, 3
    %423 = vrot.lane.b32.xlu0 %v422, 48
    %v424 = vpop.permute.xlu0 %423
    %v426 = vrot.slane %v412, 4
    %427 = vrot.lane.b32.xlu0 %v426, 64
    %v428 = vpop.permute.xlu0 %427
    %v430 = vrot.slane %v412, 5
    %431 = vrot.lane.b32.xlu0 %v430, 80
    %v432 = vpop.permute.xlu0 %431
    %v434 = vrot.slane %v412, 6
    %435 = vrot.lane.b32.xlu0 %v434, 96
    %v436 = vpop.permute.xlu0 %435
    %v438 = vrot.slane %v412, 7
    %439 = vrot.lane.b32.xlu0 %v438, 112
    %v440 = vpop.permute.xlu0 %439
    %v442 = vsel %vm107, %v412, %v416
    %v443 = vsel %vm109, %v442, %v420
    %v444 = vsel %vm111, %v443, %v424
    %v445 = vsel %vm113, %v444, %v428
    %v446 = vsel %vm115, %v445, %v432
    %v447 = vsel %vm117, %v446, %v436
    %v448 = vsel %vm119, %v447, %v440
    %s449 = scalar_lea.vmem [#allocation2], 10
    %v450 = vld [vmem:[%s449] sm:$0x3]
    %v452 = vsel %vm33, %v450, 0
    %454 = vmatprep.subr.bf16.mxu0 0
    %455 = vmatpush1.bf16.msra.mxu0 0
    %456 = vmatprep.subr.bf16.mxu0 0
    %457 = vmatpush1.bf16.msra.mxu0 0
    %458 = vmatprep.subr.bf16.mxu0 0
    %459 = vmatpush1.bf16.msra.mxu0 0
    %460 = vmatprep.subr.bf16.mxu0 0
    %461 = vmatpush1.bf16.msra.mxu0 0
    %462 = vmatprep.subr.bf16.mxu0 0
    %463 = vmatpush1.bf16.msra.mxu0 0
    %464 = vmatprep.subr.bf16.mxu0 0
    %465 = vmatpush1.bf16.msra.mxu0 0
    %466 = vmatprep.subr.bf16.mxu0 0
    %467 = vmatpush1.bf16.msra.mxu0 0
    %468 = vmatprep.subr.bf16.mxu0 0
    %469 = vmatpush1.bf16.msra.mxu0 %v452
    %470 = vmatprep.subr.bf16.mxu0 0
    %471 = vmatpush2.bf16.msra.mxu0 0
    %472 = vmatprep.subr.bf16.mxu0 0
    %473 = vmatpush2.bf16.msra.mxu0 0
    %474 = vmatprep.subr.bf16.mxu0 0
    %475 = vmatpush2.bf16.msra.mxu0 0
    %476 = vmatprep.subr.bf16.mxu0 0
    %477 = vmatpush2.bf16.msra.mxu0 0
    %478 = vmatprep.subr.bf16.mxu0 0
    %479 = vmatpush2.bf16.msra.mxu0 0
    %480 = vmatprep.subr.bf16.mxu0 0
    %481 = vmatpush2.bf16.msra.mxu0 0
    %482 = vmatprep.subr.bf16.mxu0 0
    %483 = vmatpush2.bf16.msra.mxu0 0
    %484 = vmatprep.subr.bf16.mxu0 0
    %485 = vmatpush2.bf16.msra.mxu0 0
    %486 = vmatprep.mubr.bf16.mxu0 0
    %487 = vmatmul.mubr.bf16.gmra.mxu0 %v31
    %v488 = vpop.f32.mrf.mxu0
    %v489 = vadd.f32 0.0, %v488
    %v490 = vpop.f32.mrf.mxu0
    %v491 = vpop.f32.mrf.mxu0
    %v492 = vpop.f32.mrf.mxu0
    %493 = vdwg.mxu0
    %v494 = vmax.f32 %v489, 0.0
    %v496 = vrot.slane %v494, 1
    %497 = vrot.lane.b32.xlu0 %v496, 16
    %v498 = vpop.permute.xlu0 %497
    %v500 = vrot.slane %v494, 2
    %501 = vrot.lane.b32.xlu0 %v500, 32
    %v502 = vpop.permute.xlu0 %501
    %v504 = vrot.slane %v494, 3
    %505 = vrot.lane.b32.xlu0 %v504, 48
    %v506 = vpop.permute.xlu0 %505
    %v508 = vrot.slane %v494, 4
    %509 = vrot.lane.b32.xlu0 %v508, 64
    %v510 = vpop.permute.xlu0 %509
    %v512 = vrot.slane %v494, 5
    %513 = vrot.lane.b32.xlu0 %v512, 80
    %v514 = vpop.permute.xlu0 %513
    %v516 = vrot.slane %v494, 6
    %517 = vrot.lane.b32.xlu0 %v516, 96
    %v518 = vpop.permute.xlu0 %517
    %v520 = vrot.slane %v494, 7
    %521 = vrot.lane.b32.xlu0 %v520, 112
    %v522 = vpop.permute.xlu0 %521
    %v524 = vsel %vm107, %v494, %v498
    %v525 = vsel %vm109, %v524, %v502
    %v526 = vsel %vm111, %v525, %v506
    %v527 = vsel %vm113, %v526, %v510
    %v528 = vsel %vm115, %v527, %v514
    %v529 = vsel %vm117, %v528, %v518
    %v530 = vsel %vm119, %v529, %v522
    %s531 = scalar_lea.vmem [#allocation2], 12
    %v532 = vld [vmem:[%s531] sm:$0x3]
    %v534 = vsel %vm33, %v532, 0
    %536 = vmatprep.subr.bf16.mxu0 0
    %537 = vmatpush1.bf16.msra.mxu0 0
    %538 = vmatprep.subr.bf16.mxu0 0
    %539 = vmatpush1.bf16.msra.mxu0 0
    %540 = vmatprep.subr.bf16.mxu0 0
    %541 = vmatpush1.bf16.msra.mxu0 0
    %542 = vmatprep.subr.bf16.mxu0 0
    %543 = vmatpush1.bf16.msra.mxu0 0
    %544 = vmatprep.subr.bf16.mxu0 0
    %545 = vmatpush1.bf16.msra.mxu0 0
    %546 = vmatprep.subr.bf16.mxu0 0
    %547 = vmatpush1.bf16.msra.mxu0 0
    %548 = vmatprep.subr.bf16.mxu0 0
    %549 = vmatpush1.bf16.msra.mxu0 0
    %550 = vmatprep.subr.bf16.mxu0 0
    %551 = vmatpush1.bf16.msra.mxu0 %v534
    %552 = vmatprep.subr.bf16.mxu0 0
    %553 = vmatpush2.bf16.msra.mxu0 0
    %554 = vmatprep.subr.bf16.mxu0 0
    %555 = vmatpush2.bf16.msra.mxu0 0
    %556 = vmatprep.subr.bf16.mxu0 0
    %557 = vmatpush2.bf16.msra.mxu0 0
    %558 = vmatprep.subr.bf16.mxu0 0
    %559 = vmatpush2.bf16.msra.mxu0 0
    %560 = vmatprep.subr.bf16.mxu0 0
    %561 = vmatpush2.bf16.msra.mxu0 0
    %562 = vmatprep.subr.bf16.mxu0 0
    %563 = vmatpush2.bf16.msra.mxu0 0
    %564 = vmatprep.subr.bf16.mxu0 0
    %565 = vmatpush2.bf16.msra.mxu0 0
    %566 = vmatprep.subr.bf16.mxu0 0
    %567 = vmatpush2.bf16.msra.mxu0 0
    %568 = vmatprep.mubr.bf16.mxu0 0
    %569 = vmatmul.mubr.bf16.gmra.mxu0 %v31
    %v570 = vpop.f32.mrf.mxu0
    %v571 = vadd.f32 0.0, %v570
    %v572 = vpop.f32.mrf.mxu0
    %v573 = vpop.f32.mrf.mxu0
    %v574 = vpop.f32.mrf.mxu0
    %575 = vdwg.mxu0
    %v576 = vmax.f32 %v571, 0.0
    %v578 = vrot.slane %v576, 1
    %579 = vrot.lane.b32.xlu0 %v578, 16
    %v580 = vpop.permute.xlu0 %579
    %v582 = vrot.slane %v576, 2
    %583 = vrot.lane.b32.xlu0 %v582, 32
    %v584 = vpop.permute.xlu0 %583
    %v586 = vrot.slane %v576, 3
    %587 = vrot.lane.b32.xlu0 %v586, 48
    %v588 = vpop.permute.xlu0 %587
    %v590 = vrot.slane %v576, 4
    %591 = vrot.lane.b32.xlu0 %v590, 64
    %v592 = vpop.permute.xlu0 %591
    %v594 = vrot.slane %v576, 5
    %595 = vrot.lane.b32.xlu0 %v594, 80
    %v596 = vpop.permute.xlu0 %595
    %v598 = vrot.slane %v576, 6
    %599 = vrot.lane.b32.xlu0 %v598, 96
    %v600 = vpop.permute.xlu0 %599
    %v602 = vrot.slane %v576, 7
    %603 = vrot.lane.b32.xlu0 %v602, 112
    %v604 = vpop.permute.xlu0 %603
    %v606 = vsel %vm107, %v576, %v580
    %v607 = vsel %vm109, %v606, %v584
    %v608 = vsel %vm111, %v607, %v588
    %v609 = vsel %vm113, %v608, %v592
    %v610 = vsel %vm115, %v609, %v596
    %v611 = vsel %vm117, %v610, %v600
    %v612 = vsel %vm119, %v611, %v604
    %s613 = scalar_lea.vmem [#allocation2], 14
    %v614 = vld [vmem:[%s613] sm:$0x3]
    %v616 = vsel %vm33, %v614, 0
    %618 = vmatprep.subr.bf16.mxu0 0
    %619 = vmatpush1.bf16.msra.mxu0 0
    %620 = vmatprep.subr.bf16.mxu0 0
    %621 = vmatpush1.bf16.msra.mxu0 0
    %622 = vmatprep.subr.bf16.mxu0 0
    %623 = vmatpush1.bf16.msra.mxu0 0
    %624 = vmatprep.subr.bf16.mxu0 0
    %625 = vmatpush1.bf16.msra.mxu0 0
    %626 = vmatprep.subr.bf16.mxu0 0
    %627 = vmatpush1.bf16.msra.mxu0 0
    %628 = vmatprep.subr.bf16.mxu0 0
    %629 = vmatpush1.bf16.msra.mxu0 0
    %630 = vmatprep.subr.bf16.mxu0 0
    %631 = vmatpush1.bf16.msra.mxu0 0
    %632 = vmatprep.subr.bf16.mxu0 0
    %633 = vmatpush1.bf16.msra.mxu0 %v616
    %634 = vmatprep.subr.bf16.mxu0 0
    %635 = vmatpush2.bf16.msra.mxu0 0
    %636 = vmatprep.subr.bf16.mxu0 0
    %637 = vmatpush2.bf16.msra.mxu0 0
    %638 = vmatprep.subr.bf16.mxu0 0
    %639 = vmatpush2.bf16.msra.mxu0 0
    %640 = vmatprep.subr.bf16.mxu0 0
    %641 = vmatpush2.bf16.msra.mxu0 0
    %642 = vmatprep.subr.bf16.mxu0 0
    %643 = vmatpush2.bf16.msra.mxu0 0
    %644 = vmatprep.subr.bf16.mxu0 0
    %645 = vmatpush2.bf16.msra.mxu0 0
    %646 = vmatprep.subr.bf16.mxu0 0
    %647 = vmatpush2.bf16.msra.mxu0 0
    %648 = vmatprep.subr.bf16.mxu0 0
    %649 = vmatpush2.bf16.msra.mxu0 0
    %650 = vmatprep.mubr.bf16.mxu0 0
    %651 = vmatmul.mubr.bf16.gmra.mxu0 %v31
    %v652 = vpop.f32.mrf.mxu0
    %v653 = vadd.f32 0.0, %v652
    %v654 = vpop.f32.mrf.mxu0
    %v655 = vpop.f32.mrf.mxu0
    %v656 = vpop.f32.mrf.mxu0
    %657 = vdwg.mxu0
    %v658 = vmax.f32 %v653, 0.0
    %v660 = vrot.slane %v658, 1
    %661 = vrot.lane.b32.xlu0 %v660, 16
    %v662 = vpop.permute.xlu0 %661
    %v664 = vrot.slane %v658, 2
    %665 = vrot.lane.b32.xlu0 %v664, 32
    %v666 = vpop.permute.xlu0 %665
    %v668 = vrot.slane %v658, 3
    %669 = vrot.lane.b32.xlu0 %v668, 48
    %v670 = vpop.permute.xlu0 %669
    %v672 = vrot.slane %v658, 4
    %673 = vrot.lane.b32.xlu0 %v672, 64
    %v674 = vpop.permute.xlu0 %673
    %v676 = vrot.slane %v658, 5
    %677 = vrot.lane.b32.xlu0 %v676, 80
    %v678 = vpop.permute.xlu0 %677
    %v680 = vrot.slane %v658, 6
    %681 = vrot.lane.b32.xlu0 %v680, 96
    %v682 = vpop.permute.xlu0 %681
    %v684 = vrot.slane %v658, 7
    %685 = vrot.lane.b32.xlu0 %v684, 112
    %v686 = vpop.permute.xlu0 %685
    %v688 = vsel %vm107, %v658, %v662
    %v689 = vsel %vm109, %v688, %v666
    %v690 = vsel %vm111, %v689, %v670
    %v691 = vsel %vm113, %v690, %v674
    %v692 = vsel %vm115, %v691, %v678
    %v693 = vsel %vm117, %v692, %v682
    %v694 = vsel %vm119, %v693, %v686
    %s695 = scalar_lea.vmem [#allocation2], 16
    %v696 = vld [vmem:[%s695] sm:$0x3]
    %v698 = vsel %vm33, %v696, 0
    %700 = vmatprep.subr.bf16.mxu0 0
    %701 = vmatpush1.bf16.msra.mxu0 0
    %702 = vmatprep.subr.bf16.mxu0 0
    %703 = vmatpush1.bf16.msra.mxu0 0
    %704 = vmatprep.subr.bf16.mxu0 0
    %705 = vmatpush1.bf16.msra.mxu0 0
    %706 = vmatprep.subr.bf16.mxu0 0
    %707 = vmatpush1.bf16.msra.mxu0 0
    %708 = vmatprep.subr.bf16.mxu0 0
    %709 = vmatpush1.bf16.msra.mxu0 0
    %710 = vmatprep.subr.bf16.mxu0 0
    %711 = vmatpush1.bf16.msra.mxu0 0
    %712 = vmatprep.subr.bf16.mxu0 0
    %713 = vmatpush1.bf16.msra.mxu0 0
    %714 = vmatprep.subr.bf16.mxu0 0
    %715 = vmatpush1.bf16.msra.mxu0 %v698
    %716 = vmatprep.subr.bf16.mxu0 0
    %717 = vmatpush2.bf16.msra.mxu0 0
    %718 = vmatprep.subr.bf16.mxu0 0
    %719 = vmatpush2.bf16.msra.mxu0 0
    %720 = vmatprep.subr.bf16.mxu0 0
    %721 = vmatpush2.bf16.msra.mxu0 0
    %722 = vmatprep.subr.bf16.mxu0 0
    %723 = vmatpush2.bf16.msra.mxu0 0
    %724 = vmatprep.subr.bf16.mxu0 0
    %725 = vmatpush2.bf16.msra.mxu0 0
    %726 = vmatprep.subr.bf16.mxu0 0
    %727 = vmatpush2.bf16.msra.mxu0 0
    %728 = vmatprep.subr.bf16.mxu0 0
    %729 = vmatpush2.bf16.msra.mxu0 0
    %730 = vmatprep.subr.bf16.mxu0 0
    %731 = vmatpush2.bf16.msra.mxu0 0
    %732 = vmatprep.mubr.bf16.mxu0 0
    %733 = vmatmul.mubr.bf16.gmra.mxu0 %v31
    %v734 = vpop.f32.mrf.mxu0
    %v735 = vadd.f32 0.0, %v734
    %v736 = vpop.f32.mrf.mxu0
    %v737 = vpop.f32.mrf.mxu0
    %v738 = vpop.f32.mrf.mxu0
    %739 = vdwg.mxu0
    %v740 = vmax.f32 %v735, 0.0
    %v742 = vrot.slane %v740, 1
    %743 = vrot.lane.b32.xlu0 %v742, 16
    %v744 = vpop.permute.xlu0 %743
    %v746 = vrot.slane %v740, 2
    %747 = vrot.lane.b32.xlu0 %v746, 32
    %v748 = vpop.permute.xlu0 %747
    %v750 = vrot.slane %v740, 3
    %751 = vrot.lane.b32.xlu0 %v750, 48
    %v752 = vpop.permute.xlu0 %751
    %v754 = vrot.slane %v740, 4
    %755 = vrot.lane.b32.xlu0 %v754, 64
    %v756 = vpop.permute.xlu0 %755
    %v758 = vrot.slane %v740, 5
    %759 = vrot.lane.b32.xlu0 %v758, 80
    %v760 = vpop.permute.xlu0 %759
    %v762 = vrot.slane %v740, 6
    %763 = vrot.lane.b32.xlu0 %v762, 96
    %v764 = vpop.permute.xlu0 %763
    %v766 = vrot.slane %v740, 7
    %767 = vrot.lane.b32.xlu0 %v766, 112
    %v768 = vpop.permute.xlu0 %767
    %v770 = vsel %vm107, %v740, %v744
    %v771 = vsel %vm109, %v770, %v748
    %v772 = vsel %vm111, %v771, %v752
    %v773 = vsel %vm113, %v772, %v756
    %v774 = vsel %vm115, %v773, %v760
    %v775 = vsel %vm117, %v774, %v764
    %v776 = vsel %vm119, %v775, %v768
    %s777 = scalar_lea.vmem [#allocation2], 18
    %v778 = vld [vmem:[%s777] sm:$0x3]
    %v780 = vsel %vm33, %v778, 0
    %782 = vmatprep.subr.bf16.mxu0 0
    %783 = vmatpush1.bf16.msra.mxu0 0
    %784 = vmatprep.subr.bf16.mxu0 0
    %785 = vmatpush1.bf16.msra.mxu0 0
    %786 = vmatprep.subr.bf16.mxu0 0
    %787 = vmatpush1.bf16.msra.mxu0 0
    %788 = vmatprep.subr.bf16.mxu0 0
    %789 = vmatpush1.bf16.msra.mxu0 0
    %790 = vmatprep.subr.bf16.mxu0 0
    %791 = vmatpush1.bf16.msra.mxu0 0
    %792 = vmatprep.subr.bf16.mxu0 0
    %793 = vmatpush1.bf16.msra.mxu0 0
    %794 = vmatprep.subr.bf16.mxu0 0
    %795 = vmatpush1.bf16.msra.mxu0 0
    %796 = vmatprep.subr.bf16.mxu0 0
    %797 = vmatpush1.bf16.msra.mxu0 %v780
    %798 = vmatprep.subr.bf16.mxu0 0
    %799 = vmatpush2.bf16.msra.mxu0 0
    %800 = vmatprep.subr.bf16.mxu0 0
    %801 = vmatpush2.bf16.msra.mxu0 0
    %802 = vmatprep.subr.bf16.mxu0 0
    %803 = vmatpush2.bf16.msra.mxu0 0
    %804 = vmatprep.subr.bf16.mxu0 0
    %805 = vmatpush2.bf16.msra.mxu0 0
    %806 = vmatprep.subr.bf16.mxu0 0
    %807 = vmatpush2.bf16.msra.mxu0 0
    %808 = vmatprep.subr.bf16.mxu0 0
    %809 = vmatpush2.bf16.msra.mxu0 0
    %810 = vmatprep.subr.bf16.mxu0 0
    %811 = vmatpush2.bf16.msra.mxu0 0
    %812 = vmatprep.subr.bf16.mxu0 0
    %813 = vmatpush2.bf16.msra.mxu0 0
    %814 = vmatprep.mubr.bf16.mxu0 0
    %815 = vmatmul.mubr.bf16.gmra.mxu0 %v31
    %v816 = vpop.f32.mrf.mxu0
    %v817 = vadd.f32 0.0, %v816
    %v818 = vpop.f32.mrf.mxu0
    %v819 = vpop.f32.mrf.mxu0
    %v820 = vpop.f32.mrf.mxu0
    %821 = vdwg.mxu0
    %v822 = vmax.f32 %v817, 0.0
    %v824 = vrot.slane %v822, 1
    %825 = vrot.lane.b32.xlu0 %v824, 16
    %v826 = vpop.permute.xlu0 %825
    %v828 = vrot.slane %v822, 2
    %829 = vrot.lane.b32.xlu0 %v828, 32
    %v830 = vpop.permute.xlu0 %829
    %v832 = vrot.slane %v822, 3
    %833 = vrot.lane.b32.xlu0 %v832, 48
    %v834 = vpop.permute.xlu0 %833
    %v836 = vrot.slane %v822, 4
    %837 = vrot.lane.b32.xlu0 %v836, 64
    %v838 = vpop.permute.xlu0 %837
    %v840 = vrot.slane %v822, 5
    %841 = vrot.lane.b32.xlu0 %v840, 80
    %v842 = vpop.permute.xlu0 %841
    %v844 = vrot.slane %v822, 6
    %845 = vrot.lane.b32.xlu0 %v844, 96
    %v846 = vpop.permute.xlu0 %845
    %v848 = vrot.slane %v822, 7
    %849 = vrot.lane.b32.xlu0 %v848, 112
    %v850 = vpop.permute.xlu0 %849
    %v852 = vsel %vm107, %v822, %v826
    %v853 = vsel %vm109, %v852, %v830
    %v854 = vsel %vm111, %v853, %v834
    %v855 = vsel %vm113, %v854, %v838
    %v856 = vsel %vm115, %v855, %v842
    %v857 = vsel %vm117, %v856, %v846
    %v858 = vsel %vm119, %v857, %v850
    %s859 = scalar_lea.vmem [#allocation2], 20
    %v860 = vld [vmem:[%s859] sm:$0x3]
    %v862 = vsel %vm33, %v860, 0
    %864 = vmatprep.subr.bf16.mxu0 0
    %865 = vmatpush1.bf16.msra.mxu0 0
    %866 = vmatprep.subr.bf16.mxu0 0
    %867 = vmatpush1.bf16.msra.mxu0 0
    %868 = vmatprep.subr.bf16.mxu0 0
    %869 = vmatpush1.bf16.msra.mxu0 0
    %870 = vmatprep.subr.bf16.mxu0 0
    %871 = vmatpush1.bf16.msra.mxu0 0
    %872 = vmatprep.subr.bf16.mxu0 0
    %873 = vmatpush1.bf16.msra.mxu0 0
    %874 = vmatprep.subr.bf16.mxu0 0
    %875 = vmatpush1.bf16.msra.mxu0 0
    %876 = vmatprep.subr.bf16.mxu0 0
    %877 = vmatpush1.bf16.msra.mxu0 0
    %878 = vmatprep.subr.bf16.mxu0 0
    %879 = vmatpush1.bf16.msra.mxu0 %v862
    %880 = vmatprep.subr.bf16.mxu0 0
    %881 = vmatpush2.bf16.msra.mxu0 0
    %882 = vmatprep.subr.bf16.mxu0 0
    %883 = vmatpush2.bf16.msra.mxu0 0
    %884 = vmatprep.subr.bf16.mxu0 0
    %885 = vmatpush2.bf16.msra.mxu0 0
    %886 = vmatprep.subr.bf16.mxu0 0
    %887 = vmatpush2.bf16.msra.mxu0 0
    %888 = vmatprep.subr.bf16.mxu0 0
    %889 = vmatpush2.bf16.msra.mxu0 0
    %890 = vmatprep.subr.bf16.mxu0 0
    %891 = vmatpush2.bf16.msra.mxu0 0
    %892 = vmatprep.subr.bf16.mxu0 0
    %893 = vmatpush2.bf16.msra.mxu0 0
    %894 = vmatprep.subr.bf16.mxu0 0
    %895 = vmatpush2.bf16.msra.mxu0 0
    %896 = vmatprep.mubr.bf16.mxu0 0
    %897 = vmatmul.mubr.bf16.gmra.mxu0 %v31
    %v898 = vpop.f32.mrf.mxu0
    %v899 = vadd.f32 0.0, %v898
    %v900 = vpop.f32.mrf.mxu0
    %v901 = vpop.f32.mrf.mxu0
    %v902 = vpop.f32.mrf.mxu0
    %903 = vdwg.mxu0
    %v904 = vmax.f32 %v899, 0.0
    %v906 = vrot.slane %v904, 1
    %907 = vrot.lane.b32.xlu0 %v906, 16
    %v908 = vpop.permute.xlu0 %907
    %v910 = vrot.slane %v904, 2
    %911 = vrot.lane.b32.xlu0 %v910, 32
    %v912 = vpop.permute.xlu0 %911
    %v914 = vrot.slane %v904, 3
    %915 = vrot.lane.b32.xlu0 %v914, 48
    %v916 = vpop.permute.xlu0 %915
    %v918 = vrot.slane %v904, 4
    %919 = vrot.lane.b32.xlu0 %v918, 64
    %v920 = vpop.permute.xlu0 %919
    %v922 = vrot.slane %v904, 5
    %923 = vrot.lane.b32.xlu0 %v922, 80
    %v924 = vpop.permute.xlu0 %923
    %v926 = vrot.slane %v904, 6
    %927 = vrot.lane.b32.xlu0 %v926, 96
    %v928 = vpop.permute.xlu0 %927
    %v930 = vrot.slane %v904, 7
    %931 = vrot.lane.b32.xlu0 %v930, 112
    %v932 = vpop.permute.xlu0 %931
    %v934 = vsel %vm107, %v904, %v908
    %v935 = vsel %vm109, %v934, %v912
    %v936 = vsel %vm111, %v935, %v916
    %v937 = vsel %vm113, %v936, %v920
    %v938 = vsel %vm115, %v937, %v924
    %v939 = vsel %vm117, %v938, %v928
    %v940 = vsel %vm119, %v939, %v932
    %s941 = scalar_lea.vmem [#allocation2], 22
    %v942 = vld [vmem:[%s941] sm:$0x3]
    %v944 = vsel %vm33, %v942, 0
    %946 = vmatprep.subr.bf16.mxu0 0
    %947 = vmatpush1.bf16.msra.mxu0 0
    %948 = vmatprep.subr.bf16.mxu0 0
    %949 = vmatpush1.bf16.msra.mxu0 0
    %950 = vmatprep.subr.bf16.mxu0 0
    %951 = vmatpush1.bf16.msra.mxu0 0
    %952 = vmatprep.subr.bf16.mxu0 0
    %953 = vmatpush1.bf16.msra.mxu0 0
    %954 = vmatprep.subr.bf16.mxu0 0
    %955 = vmatpush1.bf16.msra.mxu0 0
    %956 = vmatprep.subr.bf16.mxu0 0
    %957 = vmatpush1.bf16.msra.mxu0 0
    %958 = vmatprep.subr.bf16.mxu0 0
    %959 = vmatpush1.bf16.msra.mxu0 0
    %960 = vmatprep.subr.bf16.mxu0 0
    %961 = vmatpush1.bf16.msra.mxu0 %v944
    %962 = vmatprep.subr.bf16.mxu0 0
    %963 = vmatpush2.bf16.msra.mxu0 0
    %964 = vmatprep.subr.bf16.mxu0 0
    %965 = vmatpush2.bf16.msra.mxu0 0
    %966 = vmatprep.subr.bf16.mxu0 0
    %967 = vmatpush2.bf16.msra.mxu0 0
    %968 = vmatprep.subr.bf16.mxu0 0
    %969 = vmatpush2.bf16.msra.mxu0 0
    %970 = vmatprep.subr.bf16.mxu0 0
    %971 = vmatpush2.bf16.msra.mxu0 0
    %972 = vmatprep.subr.bf16.mxu0 0
    %973 = vmatpush2.bf16.msra.mxu0 0
    %974 = vmatprep.subr.bf16.mxu0 0
    %975 = vmatpush2.bf16.msra.mxu0 0
    %976 = vmatprep.subr.bf16.mxu0 0
    %977 = vmatpush2.bf16.msra.mxu0 0
    %978 = vmatprep.mubr.bf16.mxu0 0
    %979 = vmatmul.mubr.bf16.gmra.mxu0 %v31
    %v980 = vpop.f32.mrf.mxu0
    %v981 = vadd.f32 0.0, %v980
    %v982 = vpop.f32.mrf.mxu0
    %v983 = vpop.f32.mrf.mxu0
    %v984 = vpop.f32.mrf.mxu0
    %985 = vdwg.mxu0
    %v986 = vmax.f32 %v981, 0.0
    %v988 = vrot.slane %v986, 1
    %989 = vrot.lane.b32.xlu0 %v988, 16
    %v990 = vpop.permute.xlu0 %989
    %v992 = vrot.slane %v986, 2
    %993 = vrot.lane.b32.xlu0 %v992, 32
    %v994 = vpop.permute.xlu0 %993
    %v996 = vrot.slane %v986, 3
    %997 = vrot.lane.b32.xlu0 %v996, 48
    %v998 = vpop.permute.xlu0 %997
    %v1000 = vrot.slane %v986, 4
    %1001 = vrot.lane.b32.xlu0 %v1000, 64
    %v1002 = vpop.permute.xlu0 %1001
    %v1004 = vrot.slane %v986, 5
    %1005 = vrot.lane.b32.xlu0 %v1004, 80
    %v1006 = vpop.permute.xlu0 %1005
    %v1008 = vrot.slane %v986, 6
    %1009 = vrot.lane.b32.xlu0 %v1008, 96
    %v1010 = vpop.permute.xlu0 %1009
    %v1012 = vrot.slane %v986, 7
    %1013 = vrot.lane.b32.xlu0 %v1012, 112
    %v1014 = vpop.permute.xlu0 %1013
    %v1016 = vsel %vm107, %v986, %v990
    %v1017 = vsel %vm109, %v1016, %v994
    %v1018 = vsel %vm111, %v1017, %v998
    %v1019 = vsel %vm113, %v1018, %v1002
    %v1020 = vsel %vm115, %v1019, %v1006
    %v1021 = vsel %vm117, %v1020, %v1010
    %v1022 = vsel %vm119, %v1021, %v1014
    %s1023 = scalar_lea.vmem [#allocation2], 24
    %v1024 = vld [vmem:[%s1023] sm:$0x3]
    %v1026 = vsel %vm33, %v1024, 0
    %1028 = vmatprep.subr.bf16.mxu0 0
    %1029 = vmatpush1.bf16.msra.mxu0 0
    %1030 = vmatprep.subr.bf16.mxu0 0
    %1031 = vmatpush1.bf16.msra.mxu0 0
    %1032 = vmatprep.subr.bf16.mxu0 0
    %1033 = vmatpush1.bf16.msra.mxu0 0
    %1034 = vmatprep.subr.bf16.mxu0 0
    %1035 = vmatpush1.bf16.msra.mxu0 0
    %1036 = vmatprep.subr.bf16.mxu0 0
    %1037 = vmatpush1.bf16.msra.mxu0 0
    %1038 = vmatprep.subr.bf16.mxu0 0
    %1039 = vmatpush1.bf16.msra.mxu0 0
    %1040 = vmatprep.subr.bf16.mxu0 0
    %1041 = vmatpush1.bf16.msra.mxu0 0
    %1042 = vmatprep.subr.bf16.mxu0 0
    %1043 = vmatpush1.bf16.msra.mxu0 %v1026
    %1044 = vmatprep.subr.bf16.mxu0 0
    %1045 = vmatpush2.bf16.msra.mxu0 0
    %1046 = vmatprep.subr.bf16.mxu0 0
    %1047 = vmatpush2.bf16.msra.mxu0 0
    %1048 = vmatprep.subr.bf16.mxu0 0
    %1049 = vmatpush2.bf16.msra.mxu0 0
    %1050 = vmatprep.subr.bf16.mxu0 0
    %1051 = vmatpush2.bf16.msra.mxu0 0
    %1052 = vmatprep.subr.bf16.mxu0 0
    %1053 = vmatpush2.bf16.msra.mxu0 0
    %1054 = vmatprep.subr.bf16.mxu0 0
    %1055 = vmatpush2.bf16.msra.mxu0 0
    %1056 = vmatprep.subr.bf16.mxu0 0
    %1057 = vmatpush2.bf16.msra.mxu0 0
    %1058 = vmatprep.subr.bf16.mxu0 0
    %1059 = vmatpush2.bf16.msra.mxu0 0
    %1060 = vmatprep.mubr.bf16.mxu0 0
    %1061 = vmatmul.mubr.bf16.gmra.mxu0 %v31
    %v1062 = vpop.f32.mrf.mxu0
    %v1063 = vadd.f32 0.0, %v1062
    %v1064 = vpop.f32.mrf.mxu0
    %v1065 = vpop.f32.mrf.mxu0
    %v1066 = vpop.f32.mrf.mxu0
    %1067 = vdwg.mxu0
    %v1068 = vmax.f32 %v1063, 0.0
    %v1070 = vrot.slane %v1068, 1
    %1071 = vrot.lane.b32.xlu0 %v1070, 16
    %v1072 = vpop.permute.xlu0 %1071
    %v1074 = vrot.slane %v1068, 2
    %1075 = vrot.lane.b32.xlu0 %v1074, 32
    %v1076 = vpop.permute.xlu0 %1075
    %v1078 = vrot.slane %v1068, 3
    %1079 = vrot.lane.b32.xlu0 %v1078, 48
    %v1080 = vpop.permute.xlu0 %1079
    %v1082 = vrot.slane %v1068, 4
    %1083 = vrot.lane.b32.xlu0 %v1082, 64
    %v1084 = vpop.permute.xlu0 %1083
    %v1086 = vrot.slane %v1068, 5
    %1087 = vrot.lane.b32.xlu0 %v1086, 80
    %v1088 = vpop.permute.xlu0 %1087
    %v1090 = vrot.slane %v1068, 6
    %1091 = vrot.lane.b32.xlu0 %v1090, 96
    %v1092 = vpop.permute.xlu0 %1091
    %v1094 = vrot.slane %v1068, 7
    %1095 = vrot.lane.b32.xlu0 %v1094, 112
    %v1096 = vpop.permute.xlu0 %1095
    %v1098 = vsel %vm107, %v1068, %v1072
    %v1099 = vsel %vm109, %v1098, %v1076
    %v1100 = vsel %vm111, %v1099, %v1080
    %v1101 = vsel %vm113, %v1100, %v1084
    %v1102 = vsel %vm115, %v1101, %v1088
    %v1103 = vsel %vm117, %v1102, %v1092
    %v1104 = vsel %vm119, %v1103, %v1096
    %s1105 = scalar_lea.vmem [#allocation2], 26
    %v1106 = vld [vmem:[%s1105] sm:$0x3]
    %v1108 = vsel %vm33, %v1106, 0
    %1110 = vmatprep.subr.bf16.mxu0 0
    %1111 = vmatpush1.bf16.msra.mxu0 0
    %1112 = vmatprep.subr.bf16.mxu0 0
    %1113 = vmatpush1.bf16.msra.mxu0 0
    %1114 = vmatprep.subr.bf16.mxu0 0
    %1115 = vmatpush1.bf16.msra.mxu0 0
    %1116 = vmatprep.subr.bf16.mxu0 0
    %1117 = vmatpush1.bf16.msra.mxu0 0
    %1118 = vmatprep.subr.bf16.mxu0 0
    %1119 = vmatpush1.bf16.msra.mxu0 0
    %1120 = vmatprep.subr.bf16.mxu0 0
    %1121 = vmatpush1.bf16.msra.mxu0 0
    %1122 = vmatprep.subr.bf16.mxu0 0
    %1123 = vmatpush1.bf16.msra.mxu0 0
    %1124 = vmatprep.subr.bf16.mxu0 0
    %1125 = vmatpush1.bf16.msra.mxu0 %v1108
    %1126 = vmatprep.subr.bf16.mxu0 0
    %1127 = vmatpush2.bf16.msra.mxu0 0
    %1128 = vmatprep.subr.bf16.mxu0 0
    %1129 = vmatpush2.bf16.msra.mxu0 0
    %1130 = vmatprep.subr.bf16.mxu0 0
    %1131 = vmatpush2.bf16.msra.mxu0 0
    %1132 = vmatprep.subr.bf16.mxu0 0
    %1133 = vmatpush2.bf16.msra.mxu0 0
    %1134 = vmatprep.subr.bf16.mxu0 0
    %1135 = vmatpush2.bf16.msra.mxu0 0
    %1136 = vmatprep.subr.bf16.mxu0 0
    %1137 = vmatpush2.bf16.msra.mxu0 0
    %1138 = vmatprep.subr.bf16.mxu0 0
    %1139 = vmatpush2.bf16.msra.mxu0 0
    %1140 = vmatprep.subr.bf16.mxu0 0
    %1141 = vmatpush2.bf16.msra.mxu0 0
    %1142 = vmatprep.mubr.bf16.mxu0 0
    %1143 = vmatmul.mubr.bf16.gmra.mxu0 %v31
    %v1144 = vpop.f32.mrf.mxu0
    %v1145 = vadd.f32 0.0, %v1144
    %v1146 = vpop.f32.mrf.mxu0
    %v1147 = vpop.f32.mrf.mxu0
    %v1148 = vpop.f32.mrf.mxu0
    %1149 = vdwg.mxu0
    %v1150 = vmax.f32 %v1145, 0.0
    %v1152 = vrot.slane %v1150, 1
    %1153 = vrot.lane.b32.xlu0 %v1152, 16
    %v1154 = vpop.permute.xlu0 %1153
    %v1156 = vrot.slane %v1150, 2
    %1157 = vrot.lane.b32.xlu0 %v1156, 32
    %v1158 = vpop.permute.xlu0 %1157
    %v1160 = vrot.slane %v1150, 3
    %1161 = vrot.lane.b32.xlu0 %v1160, 48
    %v1162 = vpop.permute.xlu0 %1161
    %v1164 = vrot.slane %v1150, 4
    %1165 = vrot.lane.b32.xlu0 %v1164, 64
    %v1166 = vpop.permute.xlu0 %1165
    %v1168 = vrot.slane %v1150, 5
    %1169 = vrot.lane.b32.xlu0 %v1168, 80
    %v1170 = vpop.permute.xlu0 %1169
    %v1172 = vrot.slane %v1150, 6
    %1173 = vrot.lane.b32.xlu0 %v1172, 96
    %v1174 = vpop.permute.xlu0 %1173
    %v1176 = vrot.slane %v1150, 7
    %1177 = vrot.lane.b32.xlu0 %v1176, 112
    %v1178 = vpop.permute.xlu0 %1177
    %v1180 = vsel %vm107, %v1150, %v1154
    %v1181 = vsel %vm109, %v1180, %v1158
    %v1182 = vsel %vm111, %v1181, %v1162
    %v1183 = vsel %vm113, %v1182, %v1166
    %v1184 = vsel %vm115, %v1183, %v1170
    %v1185 = vsel %vm117, %v1184, %v1174
    %v1186 = vsel %vm119, %v1185, %v1178
    %s1187 = scalar_lea.vmem [#allocation2], 28
    %v1188 = vld [vmem:[%s1187] sm:$0x3]
    %v1190 = vsel %vm33, %v1188, 0
    %1192 = vmatprep.subr.bf16.mxu0 0
    %1193 = vmatpush1.bf16.msra.mxu0 0
    %1194 = vmatprep.subr.bf16.mxu0 0
    %1195 = vmatpush1.bf16.msra.mxu0 0
    %1196 = vmatprep.subr.bf16.mxu0 0
    %1197 = vmatpush1.bf16.msra.mxu0 0
    %1198 = vmatprep.subr.bf16.mxu0 0
    %1199 = vmatpush1.bf16.msra.mxu0 0
    %1200 = vmatprep.subr.bf16.mxu0 0
    %1201 = vmatpush1.bf16.msra.mxu0 0
    %1202 = vmatprep.subr.bf16.mxu0 0
    %1203 = vmatpush1.bf16.msra.mxu0 0
    %1204 = vmatprep.subr.bf16.mxu0 0
    %1205 = vmatpush1.bf16.msra.mxu0 0
    %1206 = vmatprep.subr.bf16.mxu0 0
    %1207 = vmatpush1.bf16.msra.mxu0 %v1190
    %1208 = vmatprep.subr.bf16.mxu0 0
    %1209 = vmatpush2.bf16.msra.mxu0 0
    %1210 = vmatprep.subr.bf16.mxu0 0
    %1211 = vmatpush2.bf16.msra.mxu0 0
    %1212 = vmatprep.subr.bf16.mxu0 0
    %1213 = vmatpush2.bf16.msra.mxu0 0
    %1214 = vmatprep.subr.bf16.mxu0 0
    %1215 = vmatpush2.bf16.msra.mxu0 0
    %1216 = vmatprep.subr.bf16.mxu0 0
    %1217 = vmatpush2.bf16.msra.mxu0 0
    %1218 = vmatprep.subr.bf16.mxu0 0
    %1219 = vmatpush2.bf16.msra.mxu0 0
    %1220 = vmatprep.subr.bf16.mxu0 0
    %1221 = vmatpush2.bf16.msra.mxu0 0
    %1222 = vmatprep.subr.bf16.mxu0 0
    %1223 = vmatpush2.bf16.msra.mxu0 0
    %1224 = vmatprep.mubr.bf16.mxu0 0
    %1225 = vmatmul.mubr.bf16.gmra.mxu0 %v31
    %v1226 = vpop.f32.mrf.mxu0
    %v1227 = vadd.f32 0.0, %v1226
    %v1228 = vpop.f32.mrf.mxu0
    %v1229 = vpop.f32.mrf.mxu0
    %v1230 = vpop.f32.mrf.mxu0
    %1231 = vdwg.mxu0
    %v1232 = vmax.f32 %v1227, 0.0
    %v1234 = vrot.slane %v1232, 1
    %1235 = vrot.lane.b32.xlu0 %v1234, 16
    %v1236 = vpop.permute.xlu0 %1235
    %v1238 = vrot.slane %v1232, 2
    %1239 = vrot.lane.b32.xlu0 %v1238, 32
    %v1240 = vpop.permute.xlu0 %1239
    %v1242 = vrot.slane %v1232, 3
    %1243 = vrot.lane.b32.xlu0 %v1242, 48
    %v1244 = vpop.permute.xlu0 %1243
    %v1246 = vrot.slane %v1232, 4
    %1247 = vrot.lane.b32.xlu0 %v1246, 64
    %v1248 = vpop.permute.xlu0 %1247
    %v1250 = vrot.slane %v1232, 5
    %1251 = vrot.lane.b32.xlu0 %v1250, 80
    %v1252 = vpop.permute.xlu0 %1251
    %v1254 = vrot.slane %v1232, 6
    %1255 = vrot.lane.b32.xlu0 %v1254, 96
    %v1256 = vpop.permute.xlu0 %1255
    %v1258 = vrot.slane %v1232, 7
    %1259 = vrot.lane.b32.xlu0 %v1258, 112
    %v1260 = vpop.permute.xlu0 %1259
    %v1262 = vsel %vm107, %v1232, %v1236
    %v1263 = vsel %vm109, %v1262, %v1240
    %v1264 = vsel %vm111, %v1263, %v1244
    %v1265 = vsel %vm113, %v1264, %v1248
    %v1266 = vsel %vm115, %v1265, %v1252
    %v1267 = vsel %vm117, %v1266, %v1256
    %v1268 = vsel %vm119, %v1267, %v1260
    %s1269 = scalar_lea.vmem [#allocation2], 30
    %v1270 = vld [vmem:[%s1269] sm:$0x3]
    %v1272 = vsel %vm33, %v1270, 0
    %1274 = vmatprep.subr.bf16.mxu0 0
    %1275 = vmatpush1.bf16.msra.mxu0 0
    %1276 = vmatprep.subr.bf16.mxu0 0
    %1277 = vmatpush1.bf16.msra.mxu0 0
    %1278 = vmatprep.subr.bf16.mxu0 0
    %1279 = vmatpush1.bf16.msra.mxu0 0
    %1280 = vmatprep.subr.bf16.mxu0 0
    %1281 = vmatpush1.bf16.msra.mxu0 0
    %1282 = vmatprep.subr.bf16.mxu0 0
    %1283 = vmatpush1.bf16.msra.mxu0 0
    %1284 = vmatprep.subr.bf16.mxu0 0
    %1285 = vmatpush1.bf16.msra.mxu0 0
    %1286 = vmatprep.subr.bf16.mxu0 0
    %1287 = vmatpush1.bf16.msra.mxu0 0
    %1288 = vmatprep.subr.bf16.mxu0 0
    %1289 = vmatpush1.bf16.msra.mxu0 %v1272
    %1290 = vmatprep.subr.bf16.mxu0 0
    %1291 = vmatpush2.bf16.msra.mxu0 0
    %1292 = vmatprep.subr.bf16.mxu0 0
    %1293 = vmatpush2.bf16.msra.mxu0 0
    %1294 = vmatprep.subr.bf16.mxu0 0
    %1295 = vmatpush2.bf16.msra.mxu0 0
    %1296 = vmatprep.subr.bf16.mxu0 0
    %1297 = vmatpush2.bf16.msra.mxu0 0
    %1298 = vmatprep.subr.bf16.mxu0 0
    %1299 = vmatpush2.bf16.msra.mxu0 0
    %1300 = vmatprep.subr.bf16.mxu0 0
    %1301 = vmatpush2.bf16.msra.mxu0 0
    %1302 = vmatprep.subr.bf16.mxu0 0
    %1303 = vmatpush2.bf16.msra.mxu0 0
    %1304 = vmatprep.subr.bf16.mxu0 0
    %1305 = vmatpush2.bf16.msra.mxu0 0
    %1306 = vmatprep.mubr.bf16.mxu0 0
    %1307 = vmatmul.mubr.bf16.gmra.mxu0 %v31
    %v1308 = vpop.f32.mrf.mxu0
    %v1309 = vadd.f32 0.0, %v1308
    %v1310 = vpop.f32.mrf.mxu0
    %v1311 = vpop.f32.mrf.mxu0
    %v1312 = vpop.f32.mrf.mxu0
    %1313 = vdwg.mxu0
    %v1314 = vmax.f32 %v1309, 0.0
    %v1316 = vrot.slane %v1314, 1
    %1317 = vrot.lane.b32.xlu0 %v1316, 16
    %v1318 = vpop.permute.xlu0 %1317
    %v1320 = vrot.slane %v1314, 2
    %1321 = vrot.lane.b32.xlu0 %v1320, 32
    %v1322 = vpop.permute.xlu0 %1321
    %v1324 = vrot.slane %v1314, 3
    %1325 = vrot.lane.b32.xlu0 %v1324, 48
    %v1326 = vpop.permute.xlu0 %1325
    %v1328 = vrot.slane %v1314, 4
    %1329 = vrot.lane.b32.xlu0 %v1328, 64
    %v1330 = vpop.permute.xlu0 %1329
    %v1332 = vrot.slane %v1314, 5
    %1333 = vrot.lane.b32.xlu0 %v1332, 80
    %v1334 = vpop.permute.xlu0 %1333
    %v1336 = vrot.slane %v1314, 6
    %1337 = vrot.lane.b32.xlu0 %v1336, 96
    %v1338 = vpop.permute.xlu0 %1337
    %v1340 = vrot.slane %v1314, 7
    %1341 = vrot.lane.b32.xlu0 %v1340, 112
    %v1342 = vpop.permute.xlu0 %1341
    %v1344 = vsel %vm107, %v1314, %v1318
    %v1345 = vsel %vm109, %v1344, %v1322
    %v1346 = vsel %vm111, %v1345, %v1326
    %v1347 = vsel %vm113, %v1346, %v1330
    %v1348 = vsel %vm115, %v1347, %v1334
    %v1349 = vsel %vm117, %v1348, %v1338
    %v1350 = vsel %vm119, %v1349, %v1342
    %v1352 = vrot.slane %v202, 7
    %v1355 = vrot.slane %v284, 6
    %v1358 = vrot.slane %v366, 5
    %v1361 = vrot.slane %v448, 4
    %v1364 = vrot.slane %v530, 3
    %v1367 = vrot.slane %v612, 2
    %v1370 = vrot.slane %v694, 1
    %v1373 = vrot.slane %v858, 7
    %v1376 = vrot.slane %v940, 6
    %v1379 = vrot.slane %v1022, 5
    %v1382 = vrot.slane %v1104, 4
    %v1385 = vrot.slane %v1186, 3
    %v1388 = vrot.slane %v1268, 2
    %v1391 = vrot.slane %v1350, 1
    %vm1393 = vcmask 1040384
    %v1394 = vsel %vm1393, %v120, %v1352
    %v1395 = vsel %vm33, %v1394, %v1355
    %vm1396 = vcmask 1042432
    %v1397 = vsel %vm1396, %v1395, %v1358
    %vm1398 = vcmask 1043456
    %v1399 = vsel %vm1398, %v1397, %v1361
    %vm1400 = vcmask 1044480
    %v1401 = vsel %vm1400, %v1399, %v1364
    %vm1402 = vcmask 1045504
    %v1403 = vsel %vm1402, %v1401, %v1367
    %vm1404 = vcmask 1046528
    %v1405 = vsel %vm1404, %v1403, %v1370
    %v1406 = vsel %vm1393, %v776, %v1373
    %v1407 = vsel %vm33, %v1406, %v1376
    %v1408 = vsel %vm1396, %v1407, %v1379
    %v1409 = vsel %vm1398, %v1408, %v1382
    %v1410 = vsel %vm1400, %v1409, %v1385
    %v1411 = vsel %vm1402, %v1410, %v1388
    %v1412 = vsel %vm1404, %v1411, %v1391
    %v1413 = vpack.c.bf16 %v1412, %v1405
    %v1415 = vunpack.c.l.b16 %v1413
    %v1416 = vunpack.c.h.b16 %v1413
    %v1417 = vpack.c.b16 %v1415, %v1415
    %v1418 = vpack.c.b16 %v1416, %v1416
    %1421 = vst [vmem:[#allocation5] sm:$0xf] %v1417
    %1422 = vst [vmem:[#allocation5 + $0x4] sm:$0xf] %v1418
    // Predicated region
    $region14: #{tpu_custom_call.1} parent=1 // pred_check
      _
    $region15: #{tpu_custom_call.1} parent=1 // pred_check_branch
      %1424 = sbr.rel (0) target = $region17
    $region16: #{tpu_custom_call.1} parent=1 // pred_region
      %s1426 = ssub.s32 128, 128
      %1427 = vsyncadd [#allocation4], %s1426
      %s1428 = sshll.u32 [#allocation5], 4
      %s1429 = int_to_ptr.vmem [resolvable:$true] %s1428
      %1434 = dma.vmem_to_hbm [thread:$0]  %s1429, 128, %s2, [#allocation4], 64, 64, 4
    $region17: #{tpu_custom_call.1} parent=1 // pred_fallthru
      _
    // Predicated region
    $region18: #{tpu_custom_call.1} parent=1 // pred_check
      _
    $region19: #{tpu_custom_call.1} parent=1 // pred_check_branch
      %1436 = sbr.rel (0) target = $region21
    $region20: #{tpu_custom_call.1} parent=1 // pred_region
      %1437 = dma.done [#allocation4], 128
    $region21: #{tpu_custom_call.1} parent=1 // pred_fallthru
      _
    %1438 = vsyncpa [#allocation3], 1
    %1439 = vsyncpa [#allocation4], 1

</llo_original>
